<compile_context>
chip_gen: v6e
topology: v6e:2x2x1
jax: 0.10.0
libtpu: 0.0.40
codegen_flags: <defaults>
</compile_context>

<pallas_src>
import functools

import numpy as np

import jax
import jax.numpy as jnp
from jax.experimental import pallas as pl
from jax.experimental.pallas import tpu as pltpu


def _round_up(v, m):
    return -(-v // m) * m


def _tensorcores_per_chip():
    """Best-effort TensorCore count of the attached chip (2 on v7x/v4/v5p)."""
    try:
        kind = jax.devices()[0].device_kind.lower()
    except Exception:
        return 1
    if "v7" in kind or "v4" in kind:
        return 2
    if "v5" in kind and "lite" not in kind and "5e" not in kind:
        return 2  # v5p megacore
    return 1


def _pick_pb(n, c):
    """Images packed per 8-sublane f32 vreg (pb*C <= 8 and pb divides N)."""
    if c < 8 and 8 % c == 0:
        for pb in range(8 // c, 0, -1):
            if n % pb == 0:
                return pb
    return 1


def _pick_nb(nsb, per_sb_bytes, tc_count):
    """Packed blocks per grid step: 1 step on 1-TC chips, >= 2 steps on 2-TC."""
    cap = max(1, (8 << 20) // max(4 * per_sb_bytes, 1))  # ~8 MiB of I/O blocks
    cap = min(cap, nsb)
    if tc_count >= 2 and nsb >= 2:
        cap = min(cap, nsb // 2)          # leave work for the second core
    nb = 1
    for d in range(1, cap + 1):
        if nsb % d == 0:                  # divisor only: never drop batches
            nb = d
    return nb


def _gra_kernel(x_ref, y_ref, w1_ref, b1_ref, w2_ref, b2_ref,
                xout_ref, yout_ref,
                xypad_ref, xopad_ref, stk_ref, *, width, pb):
    # Shapes (per grid step):
    #   x_ref    : (nb, pb*C, HW)       packed images, channels on sublanes
    #   y_ref    : (nb, pb, HW)
    #   w1_ref   : (pb*C, K1p)          conv1 weight, x_cat + 9 taps folded in
    #   b1_ref   : (pb*C, 1)
    #   w2_ref   : (pb, 9*pb*C)         score-conv weight
    #   b2_ref   : (1, 1)
    #   xout_ref : (nb, pb*C, HW)
    #   yout_ref : (nb, pb, HW)
    #   xypad_ref: (pb*C + pb, L)       flat zero-padded (x, y) staging
    #   xopad_ref: (pb*C, L)            flat zero-padded x_out staging
    #   stk_ref  : (K1p, HW)            sublane-stacked shifted tap windows
    nb, pbC, HW = x_ref.shape
    pbCp1 = pbC + pb
    P = width + 1                        # flat zero border covers SAME rows
    L = HW + 2 * P
    KX = 9 * pbC                         # stacked x-window rows (both convs)
    K1 = KX + 9 * pb                     # + stacked y-window rows (conv1)
    K1p = stk_ref.shape[0]               # padded to a sublane multiple
    f32 = jnp.float32

    # Column-validity masks built on-chip (no HBM mask input).
    lane = jax.lax.broadcasted_iota(jnp.int32, (1, HW), 1)
    if (width & (width - 1)) == 0:
        col = lane & (width - 1)
    else:
        col = lane % width               # non-power-of-2 W: integer remainder
    m_l = (col > 0).astype(f32)          # lane may read its left neighbour
    m_r = (col < width - 1).astype(f32)  # lane may read its right neighbour
    # Hoisted broadcasts so the tap loops don't re-materialize them.
    m_l_x = jnp.broadcast_to(m_l, (pbC, HW))
    m_r_x = jnp.broadcast_to(m_r, (pbC, HW))
    m_l_y = jnp.broadcast_to(m_l, (pb, HW))
    m_r_y = jnp.broadcast_to(m_r, (pb, HW))

    def masked(v, dx, ml, mr):
        if dx == -1:
            return v * ml
        if dx == 1:
            return v * mr
        return v

    # Zero only the flat-pad borders and the weight-pad rows; interiors are
    # fully overwritten below.  Done every grid step so the kernel stays
    # correct when the "parallel" axis is sharded across TensorCores.
    xypad_ref[:, 0:P] = jnp.zeros((pbCp1, P), f32)
    xypad_ref[:, P + HW:L] = jnp.zeros((pbCp1, P), f32)
    xopad_ref[:, 0:P] = jnp.zeros((pbC, P), f32)
    xopad_ref[:, P + HW:L] = jnp.zeros((pbC, P), f32)
    if K1p > K1:
        stk_ref[K1:K1p, :] = jnp.zeros((K1p - K1, HW), f32)

    w1 = w1_ref[...]                     # (pbC, K1p)
    w2 = w2_ref[...]                     # (pb, KX)
    b1 = b1_ref[...]                     # (pbC, 1)
    b2 = b2_ref[...]                     # (1, 1)

    taps = [(dy, dx) for dy in (-1, 0, 1) for dx in (-1, 0, 1)]

    def process(b, carry):
        xb = x_ref[b]                    # (pbC, HW)
        yb = y_ref[b]                    # (pb, HW)

        # Stage flat zero-padded copies used for the shifted-window reads.
        xypad_ref[0:pbC, P:P + HW] = xb
        xypad_ref[pbC:pbCp1, P:P + HW] = yb

        # ---- conv1: stage 9 masked shifted (x, y) windows, one MXU matmul.
        for t, (dy, dx) in enumerate(taps):
            start = P + dy * width + dx
            winx = xypad_ref[0:pbC, start:start + HW]
            winy = xypad_ref[pbC:pbCp1, start:start + HW]
            stk_ref[t * pbC:(t + 1) * pbC, :] = masked(winx, dx, m_l_x, m_r_x)
            stk_ref[KX + t * pb:KX + (t + 1) * pb, :] = masked(
                winy, dx, m_l_y, m_r_y)

        acc1 = jnp.dot(w1, stk_ref[...], preferred_element_type=f32)
        x_out = xb + jnp.maximum(acc1 + b1, 0.0)            # residual + ReLU
        xout_ref[b] = x_out.astype(xout_ref.dtype)          # lane-dense store

        # ---- conv2 (score): same staging on x_out, one (pb, 9*pbC) matmul.
        xopad_ref[:, P:P + HW] = x_out
        for t, (dy, dx) in enumerate(taps):
            start = P + dy * width + dx
            win = xopad_ref[:, start:start + HW]
            stk_ref[t * pbC:(t + 1) * pbC, :] = masked(win, dx, m_l_x, m_r_x)

        score = jnp.dot(w2, stk_ref[0:KX, :], preferred_element_type=f32)
        yout_ref[b] = (yb + score + b2).astype(yout_ref.dtype)
        return carry

    if nb <= 2:                          # tiny trip count: static unroll
        for b in range(nb):
            process(b, 0)
    else:                                # bound vreg live ranges at larger nb
        jax.lax.fori_loop(0, nb, process, 0)


def gra_forward(x_nchw, y_nchw, w1_hwio, b1, w2_hwio, b2, group):
    """Pallas implementation of GRA.forward (NCHW in / NCHW out)."""
    N, C, H, W = x_nchw.shape
    HW = H * W
    sub = C // group

    pb = _pick_pb(N, C)
    pbC = pb * C
    pbCp1 = pbC + pb
    Nsb = N // pb

    # Positions of the x channels / the repeated y channel inside x_cat.
    x_pos = np.asarray([g * (sub + 1) + s for g in range(group)
                        for s in range(sub)])
    y_pos = np.asarray([g * (sub + 1) + sub for g in range(group)])

    # Per-tap weights with the x_cat interleave folded in; y copies pre-summed.
    w1x = jnp.transpose(w1_hwio[:, :, x_pos, :], (0, 1, 3, 2))
    w1x = w1x.reshape(9, C, C).astype(jnp.float32)            # (tap, out, in)
    w1y = jnp.sum(w1_hwio[:, :, y_pos, :], axis=2)
    w1y = w1y.reshape(9, C).astype(jnp.float32)                # (tap, out)
    w2t = w2_hwio.reshape(9, C).astype(jnp.float32)            # (tap, in)

    # Block-diagonal (per packed image) stacked-window weights.
    KX = 9 * pbC
    K1 = KX + 9 * pb
    K1p = _round_up(K1, 8)
    eye = jnp.eye(pb, dtype=jnp.float32)
    W1x = jnp.einsum("pq,toc->potqc", eye, w1x).reshape(pbC, KX)
    W1y = jnp.einsum("pq,to->potq", eye, w1y).reshape(pbC, 9 * pb)
    W1 = jnp.pad(jnp.concatenate([W1x, W1y], axis=1),
                 ((0, 0), (0, K1p - K1)))                       # (pbC, K1p)
    W2 = jnp.einsum("pq,tc->ptqc", eye, w2t).reshape(pb, KX)    # (pb, KX)
    b1p = jnp.tile(b1.reshape(1, C).astype(jnp.float32),
                   (pb, 1)).reshape(pbC, 1)
    b2p = b2.reshape(1, 1).astype(jnp.float32)

    # Free reshapes: pack pb consecutive images onto sublanes, pixels on lanes.
    x2 = x_nchw.reshape(Nsb, pbC, HW).astype(jnp.float32)
    y2 = y_nchw.reshape(Nsb, pb, HW).astype(jnp.float32)

    nb = _pick_nb(Nsb, pbCp1 * HW * 4, _tensorcores_per_chip())
    grid = (Nsb // nb,)
    L = HW + 2 * (W + 1)

    # Explicit VMEM budget (block I/O is double-buffered by the pipeline).
    io_block = 2 * nb * pbCp1 * HW * 4
    scratch = (pbCp1 * L + pbC * L + K1p * HW) * 4
    weights = (pbC * K1p + pb * KX + pbC + 1) * 4
    vmem_need = 2 * io_block + scratch + 2 * weights
    vmem_limit = int(min(48 << 20, max(32 << 20, vmem_need + (4 << 20))))

    kernel = pl.pallas_call(
        functools.partial(_gra_kernel, width=W, pb=pb),
        out_shape=(
            jax.ShapeDtypeStruct((Nsb, pbC, HW), jnp.float32),
            jax.ShapeDtypeStruct((Nsb, pb, HW), jnp.float32),
        ),
        grid_spec=pltpu.PrefetchScalarGridSpec(
            num_scalar_prefetch=0,
            grid=grid,
            in_specs=[
                pl.BlockSpec((nb, pbC, HW), lambda n: (n, 0, 0)),   # x
                pl.BlockSpec((nb, pb, HW), lambda n: (n, 0, 0)),    # y
                pl.BlockSpec((pbC, K1p), lambda n: (0, 0)),         # W1
                pl.BlockSpec((pbC, 1), lambda n: (0, 0)),           # b1
                pl.BlockSpec((pb, KX), lambda n: (0, 0)),           # W2
                pl.BlockSpec((1, 1), lambda n: (0, 0)),             # b2
            ],
            out_specs=[
                pl.BlockSpec((nb, pbC, HW), lambda n: (n, 0, 0)),
                pl.BlockSpec((nb, pb, HW), lambda n: (n, 0, 0)),
            ],
            scratch_shapes=[
                pltpu.VMEM((pbCp1, L), jnp.float32),   # padded (x, y)
                pltpu.VMEM((pbC, L), jnp.float32),     # padded x_out
                pltpu.VMEM((K1p, HW), jnp.float32),    # stacked tap windows
            ],
        ),
        compiler_params=pltpu.CompilerParams(
            dimension_semantics=("parallel",),
            vmem_limit_bytes=vmem_limit,
        ),
    )

    xo, yo = kernel(x2, y2, W1, b1p, W2, b2p)
    return xo.reshape(N, C, H, W), yo.reshape(N, 1, H, W)


def gra_reference(x, y, w1_hwio, b1, w2_hwio, b2, group):
    """Pure-JAX reference (NCHW), same semantics as the PyTorch module."""
    xs = jnp.split(x, group, axis=1)
    parts = []
    for xc in xs:
        parts.append(xc)
        parts.append(y)
    x_cat = jnp.concatenate(parts, axis=1)

    def conv(inp, w_hwio, b):
        out = jax.lax.conv_general_dilated(
            inp, w_hwio, window_strides=(1, 1), padding="SAME",
            dimension_numbers=("NCHW", "HWIO", "NCHW"))
        return out + b.reshape(1, -1, 1, 1)

    x_out = x + jnp.maximum(conv(x_cat, w1_hwio, b1), 0.0)
    y_out = y + conv(x_out, w2_hwio, b2)
    return x_out, y_out


if __name__ == "__main__":
    # Small shapes: batch=2, channel=4, subchannel=2 -> group=2, spatial=16.
    N, C, H, W = 2, 4, 16, 16
    subchannel = 2
    group = C // subchannel
    Cin = C + group

    key = jax.random.PRNGKey(0)
    kx, ky, kw1, kb1, kw2, kb2 = jax.random.split(key, 6)

    x = jax.random.normal(kx, (N, C, H, W), dtype=jnp.float32)
    y = jax.random.normal(ky, (N, 1, H, W), dtype=jnp.float32)

    # Deterministic parameter init (synthetic -- not a checkpoint load).
    w1 = 0.1 * jax.random.normal(kw1, (3, 3, Cin, C), dtype=jnp.float32)
    b1 = 0.1 * jax.random.normal(kb1, (C,), dtype=jnp.float32)
    w2 = 0.1 * jax.random.normal(kw2, (3, 3, C, 1), dtype=jnp.float32)
    b2 = 0.1 * jax.random.normal(kb2, (1,), dtype=jnp.float32)

    fwd = jax.jit(functools.partial(gra_forward, group=group))
    x_out, y_out = fwd(x, y, w1, b1, w2, b2)
    jax.block_until_ready((x_out, y_out))

    x_ref, y_ref = gra_reference(x, y, w1, b1, w2, b2, group)
    assert jnp.allclose(x_out, x_ref, atol=1e-4, rtol=1e-4), "x mismatch"
    assert jnp.allclose(y_out, y_ref, atol=1e-4, rtol=1e-4), "y mismatch"

    print("KERNEL_OK")
</pallas_src>

<mosaic_0001>
module attributes {stable_mosaic.version = 11 : i64} {
  func.func @_gra_kernel(%arg0: i32, %arg1: memref<1x8x256xf32, #tpu.memory_space<vmem>>, %arg2: memref<1x2x256xf32, #tpu.memory_space<vmem>>, %arg3: memref<8x96xf32, #tpu.memory_space<vmem>>, %arg4: memref<8x1xf32, #tpu.memory_space<vmem>>, %arg5: memref<2x72xf32, #tpu.memory_space<vmem>>, %arg6: memref<1x1xf32, #tpu.memory_space<vmem>>, %arg7: memref<1x8x256xf32, #tpu.memory_space<vmem>>, %arg8: memref<1x2x256xf32, #tpu.memory_space<vmem>>, %arg9: memref<10x290xf32, #tpu.memory_space<vmem>>, %arg10: memref<8x290xf32, #tpu.memory_space<vmem>>, %arg11: memref<96x256xf32, #tpu.memory_space<vmem>>) attributes {dimension_semantics = [#tpu.dimension_semantics<parallel>], iteration_bounds = array<i64: 1>, scalar_prefetch = 0 : i64, scratch_operands = 3 : i64, tpu.core_type = #tpu.core_type<tc>, window_params = [{transform_indices = @transform_0, window_bounds = array<i64: 1, 8, 256>}, {transform_indices = @transform_1, window_bounds = array<i64: 1, 2, 256>}, {pipeline_mode = #tpu.pipeline_mode<synchronous>, transform_indices = @transform_2, window_bounds = array<i64: 8, 96>}, {pipeline_mode = #tpu.pipeline_mode<synchronous>, transform_indices = @transform_3, window_bounds = array<i64: 8, 1>}, {pipeline_mode = #tpu.pipeline_mode<synchronous>, transform_indices = @transform_4, window_bounds = array<i64: 2, 72>}, {pipeline_mode = #tpu.pipeline_mode<synchronous>, transform_indices = @transform_5, window_bounds = array<i64: 1, 1>}, {transform_indices = @transform_6, window_bounds = array<i64: 1, 8, 256>}, {transform_indices = @transform_7, window_bounds = array<i64: 1, 2, 256>}]} {
    %0 = tpu.iota {dimensions = array<i32: 1>} : vector<1x256xi32>
    %c15_i32 = arith.constant 15 : i32
    %1 = vector.broadcast %c15_i32 : i32 to vector<1x256xi32>
    %2 = arith.andi %0, %1 : vector<1x256xi32>
    %c0_i32 = arith.constant 0 : i32
    %3 = vector.broadcast %c0_i32 : i32 to vector<1x256xi32>
    %4 = arith.cmpi sgt, %2, %3 : vector<1x256xi32>
    %5 = arith.extui %4 : vector<1x256xi1> to vector<1x256xi32>
    %6 = arith.sitofp %5 : vector<1x256xi32> to vector<1x256xf32>
    %c15_i32_0 = arith.constant 15 : i32
    %7 = vector.broadcast %c15_i32_0 : i32 to vector<1x256xi32>
    %8 = arith.cmpi slt, %2, %7 : vector<1x256xi32>
    %9 = arith.extui %8 : vector<1x256xi1> to vector<1x256xi32>
    %10 = arith.sitofp %9 : vector<1x256xi32> to vector<1x256xf32>
    %11 = vector.shape_cast %6 : vector<1x256xf32> to vector<1x256xf32>
    %12 = vector.broadcast %11 : vector<1x256xf32> to vector<8x256xf32>
    %13 = vector.shape_cast %10 : vector<1x256xf32> to vector<1x256xf32>
    %14 = vector.broadcast %13 : vector<1x256xf32> to vector<8x256xf32>
    %15 = vector.shape_cast %6 : vector<1x256xf32> to vector<1x256xf32>
    %16 = vector.broadcast %15 : vector<1x256xf32> to vector<2x256xf32>
    %17 = vector.shape_cast %10 : vector<1x256xf32> to vector<1x256xf32>
    %18 = vector.broadcast %17 : vector<1x256xf32> to vector<2x256xf32>
    %cst = arith.constant 0.000000e+00 : f32
    %19 = vector.broadcast %cst : f32 to vector<10x17xf32>
    %c0 = arith.constant 0 : index
    %c0_1 = arith.constant 0 : index
    %20 = vector.load %arg9[%c0, %c0_1] : memref<10x290xf32, #tpu.memory_space<vmem>>, vector<10x17xf32>
    tpu.vector_store %arg9[%c0, %c0_1], %19 {strides = array<i32>} : memref<10x290xf32, #tpu.memory_space<vmem>>, vector<10x17xf32>,
    %cst_2 = arith.constant 0.000000e+00 : f32
    %21 = vector.broadcast %cst_2 : f32 to vector<10x17xf32>
    %c0_3 = arith.constant 0 : index
    %c273 = arith.constant 273 : index
    %22 = vector.load %arg9[%c0_3, %c273] : memref<10x290xf32, #tpu.memory_space<vmem>>, vector<10x17xf32>
    tpu.vector_store %arg9[%c0_3, %c273], %21 {strides = array<i32>} : memref<10x290xf32, #tpu.memory_space<vmem>>, vector<10x17xf32>,
    %cst_4 = arith.constant 0.000000e+00 : f32
    %23 = vector.broadcast %cst_4 : f32 to vector<8x17xf32>
    %c0_5 = arith.constant 0 : index
    %c0_6 = arith.constant 0 : index
    %24 = vector.load %arg10[%c0_5, %c0_6] : memref<8x290xf32, #tpu.memory_space<vmem>>, vector<8x17xf32>
    tpu.vector_store %arg10[%c0_5, %c0_6], %23 {strides = array<i32>} : memref<8x290xf32, #tpu.memory_space<vmem>>, vector<8x17xf32>,
    %cst_7 = arith.constant 0.000000e+00 : f32
    %25 = vector.broadcast %cst_7 : f32 to vector<8x17xf32>
    %c0_8 = arith.constant 0 : index
    %c273_9 = arith.constant 273 : index
    %26 = vector.load %arg10[%c0_8, %c273_9] : memref<8x290xf32, #tpu.memory_space<vmem>>, vector<8x17xf32>
    tpu.vector_store %arg10[%c0_8, %c273_9], %25 {strides = array<i32>} : memref<8x290xf32, #tpu.memory_space<vmem>>, vector<8x17xf32>,
    %cst_10 = arith.constant 0.000000e+00 : f32
    %27 = vector.broadcast %cst_10 : f32 to vector<6x256xf32>
    %c90 = arith.constant 90 : index
    %c0_11 = arith.constant 0 : index
    %28 = vector.load %arg11[%c90, %c0_11] : memref<96x256xf32, #tpu.memory_space<vmem>>, vector<6x256xf32>
    tpu.vector_store %arg11[%c90, %c0_11], %27 {strides = array<i32>} : memref<96x256xf32, #tpu.memory_space<vmem>>, vector<6x256xf32>,
    %c0_12 = arith.constant 0 : index
    %c0_13 = arith.constant 0 : index
    %29 = vector.load %arg3[%c0_12, %c0_13] : memref<8x96xf32, #tpu.memory_space<vmem>>, vector<8x96xf32>
    %c0_14 = arith.constant 0 : index
    %c0_15 = arith.constant 0 : index
    %30 = vector.load %arg5[%c0_14, %c0_15] : memref<2x72xf32, #tpu.memory_space<vmem>>, vector<2x72xf32>
    %c0_16 = arith.constant 0 : index
    %c0_17 = arith.constant 0 : index
    %31 = vector.load %arg4[%c0_16, %c0_17] : memref<8x1xf32, #tpu.memory_space<vmem>>, vector<8x1xf32>
    %c0_18 = arith.constant 0 : index
    %c0_19 = arith.constant 0 : index
    %32 = vector.load %arg6[%c0_18, %c0_19] : memref<1x1xf32, #tpu.memory_space<vmem>>, vector<1x1xf32>
    %c0_20 = arith.constant 0 : index
    %c0_21 = arith.constant 0 : index
    %c0_22 = arith.constant 0 : index
    %33 = vector.load %arg1[%c0_20, %c0_21, %c0_22] : memref<1x8x256xf32, #tpu.memory_space<vmem>>, vector<1x8x256xf32>
    %34 = vector.shape_cast %33 : vector<1x8x256xf32> to vector<8x256xf32>
    %c0_23 = arith.constant 0 : index
    %c0_24 = arith.constant 0 : index
    %c0_25 = arith.constant 0 : index
    %35 = vector.load %arg2[%c0_23, %c0_24, %c0_25] : memref<1x2x256xf32, #tpu.memory_space<vmem>>, vector<1x2x256xf32>
    %36 = vector.shape_cast %35 : vector<1x2x256xf32> to vector<2x256xf32>
    %c0_26 = arith.constant 0 : index
    %c17 = arith.constant 17 : index
    %37 = vector.load %arg9[%c0_26, %c17] : memref<10x290xf32, #tpu.memory_space<vmem>>, vector<8x256xf32>
    tpu.vector_store %arg9[%c0_26, %c17], %34 {strides = array<i32>} : memref<10x290xf32, #tpu.memory_space<vmem>>, vector<8x256xf32>,
    %c8 = arith.constant 8 : index
    %c17_27 = arith.constant 17 : index
    %38 = vector.load %arg9[%c8, %c17_27] : memref<10x290xf32, #tpu.memory_space<vmem>>, vector<2x256xf32>
    tpu.vector_store %arg9[%c8, %c17_27], %36 {strides = array<i32>} : memref<10x290xf32, #tpu.memory_space<vmem>>, vector<2x256xf32>,
    %c0_28 = arith.constant 0 : index
    %c0_29 = arith.constant 0 : index
    %39 = vector.load %arg9[%c0_28, %c0_29] : memref<10x290xf32, #tpu.memory_space<vmem>>, vector<8x256xf32>
    %c8_30 = arith.constant 8 : index
    %c0_31 = arith.constant 0 : index
    %40 = vector.load %arg9[%c8_30, %c0_31] : memref<10x290xf32, #tpu.memory_space<vmem>>, vector<2x256xf32>
    %41 = arith.mulf %39, %12 : vector<8x256xf32>
    %c0_32 = arith.constant 0 : index
    %c0_33 = arith.constant 0 : index
    %42 = vector.load %arg11[%c0_32, %c0_33] : memref<96x256xf32, #tpu.memory_space<vmem>>, vector<8x256xf32>
    tpu.vector_store %arg11[%c0_32, %c0_33], %41 {strides = array<i32>} : memref<96x256xf32, #tpu.memory_space<vmem>>, vector<8x256xf32>,
    %43 = arith.mulf %40, %16 : vector<2x256xf32>
    %c72 = arith.constant 72 : index
    %c0_34 = arith.constant 0 : index
    %44 = vector.load %arg11[%c72, %c0_34] : memref<96x256xf32, #tpu.memory_space<vmem>>, vector<2x256xf32>
    tpu.vector_store %arg11[%c72, %c0_34], %43 {strides = array<i32>} : memref<96x256xf32, #tpu.memory_space<vmem>>, vector<2x256xf32>,
    %c0_35 = arith.constant 0 : index
    %c1 = arith.constant 1 : index
    %45 = vector.load %arg9[%c0_35, %c1] : memref<10x290xf32, #tpu.memory_space<vmem>>, vector<8x256xf32>
    %c8_36 = arith.constant 8 : index
    %c1_37 = arith.constant 1 : index
    %46 = vector.load %arg9[%c8_36, %c1_37] : memref<10x290xf32, #tpu.memory_space<vmem>>, vector<2x256xf32>
    %c8_38 = arith.constant 8 : index
    %c0_39 = arith.constant 0 : index
    %47 = vector.load %arg11[%c8_38, %c0_39] : memref<96x256xf32, #tpu.memory_space<vmem>>, vector<8x256xf32>
    tpu.vector_store %arg11[%c8_38, %c0_39], %45 {strides = array<i32>} : memref<96x256xf32, #tpu.memory_space<vmem>>, vector<8x256xf32>,
    %c74 = arith.constant 74 : index
    %c0_40 = arith.constant 0 : index
    %48 = vector.load %arg11[%c74, %c0_40] : memref<96x256xf32, #tpu.memory_space<vmem>>, vector<2x256xf32>
    tpu.vector_store %arg11[%c74, %c0_40], %46 {strides = array<i32>} : memref<96x256xf32, #tpu.memory_space<vmem>>, vector<2x256xf32>,
    %c0_41 = arith.constant 0 : index
    %c2 = arith.constant 2 : index
    %49 = vector.load %arg9[%c0_41, %c2] : memref<10x290xf32, #tpu.memory_space<vmem>>, vector<8x256xf32>
    %c8_42 = arith.constant 8 : index
    %c2_43 = arith.constant 2 : index
    %50 = vector.load %arg9[%c8_42, %c2_43] : memref<10x290xf32, #tpu.memory_space<vmem>>, vector<2x256xf32>
    %51 = arith.mulf %49, %14 : vector<8x256xf32>
    %c16 = arith.constant 16 : index
    %c0_44 = arith.constant 0 : index
    %52 = vector.load %arg11[%c16, %c0_44] : memref<96x256xf32, #tpu.memory_space<vmem>>, vector<8x256xf32>
    tpu.vector_store %arg11[%c16, %c0_44], %51 {strides = array<i32>} : memref<96x256xf32, #tpu.memory_space<vmem>>, vector<8x256xf32>,
    %53 = arith.mulf %50, %18 : vector<2x256xf32>
    %c76 = arith.constant 76 : index
    %c0_45 = arith.constant 0 : index
    %54 = vector.load %arg11[%c76, %c0_45] : memref<96x256xf32, #tpu.memory_space<vmem>>, vector<2x256xf32>
    tpu.vector_store %arg11[%c76, %c0_45], %53 {strides = array<i32>} : memref<96x256xf32, #tpu.memory_space<vmem>>, vector<2x256xf32>,
    %c0_46 = arith.constant 0 : index
    %c16_47 = arith.constant 16 : index
    %55 = vector.load %arg9[%c0_46, %c16_47] : memref<10x290xf32, #tpu.memory_space<vmem>>, vector<8x256xf32>
    %c8_48 = arith.constant 8 : index
    %c16_49 = arith.constant 16 : index
    %56 = vector.load %arg9[%c8_48, %c16_49] : memref<10x290xf32, #tpu.memory_space<vmem>>, vector<2x256xf32>
    %57 = arith.mulf %55, %12 : vector<8x256xf32>
    %c24 = arith.constant 24 : index
    %c0_50 = arith.constant 0 : index
    %58 = vector.load %arg11[%c24, %c0_50] : memref<96x256xf32, #tpu.memory_space<vmem>>, vector<8x256xf32>
    tpu.vector_store %arg11[%c24, %c0_50], %57 {strides = array<i32>} : memref<96x256xf32, #tpu.memory_space<vmem>>, vector<8x256xf32>,
    %59 = arith.mulf %56, %16 : vector<2x256xf32>
    %c78 = arith.constant 78 : index
    %c0_51 = arith.constant 0 : index
    %60 = vector.load %arg11[%c78, %c0_51] : memref<96x256xf32, #tpu.memory_space<vmem>>, vector<2x256xf32>
    tpu.vector_store %arg11[%c78, %c0_51], %59 {strides = array<i32>} : memref<96x256xf32, #tpu.memory_space<vmem>>, vector<2x256xf32>,
    %c0_52 = arith.constant 0 : index
    %c17_53 = arith.constant 17 : index
    %61 = vector.load %arg9[%c0_52, %c17_53] : memref<10x290xf32, #tpu.memory_space<vmem>>, vector<8x256xf32>
    %c8_54 = arith.constant 8 : index
    %c17_55 = arith.constant 17 : index
    %62 = vector.load %arg9[%c8_54, %c17_55] : memref<10x290xf32, #tpu.memory_space<vmem>>, vector<2x256xf32>
    %c32 = arith.constant 32 : index
    %c0_56 = arith.constant 0 : index
    %63 = vector.load %arg11[%c32, %c0_56] : memref<96x256xf32, #tpu.memory_space<vmem>>, vector<8x256xf32>
    tpu.vector_store %arg11[%c32, %c0_56], %61 {strides = array<i32>} : memref<96x256xf32, #tpu.memory_space<vmem>>, vector<8x256xf32>,
    %c80 = arith.constant 80 : index
    %c0_57 = arith.constant 0 : index
    %64 = vector.load %arg11[%c80, %c0_57] : memref<96x256xf32, #tpu.memory_space<vmem>>, vector<2x256xf32>
    tpu.vector_store %arg11[%c80, %c0_57], %62 {strides = array<i32>} : memref<96x256xf32, #tpu.memory_space<vmem>>, vector<2x256xf32>,
    %c0_58 = arith.constant 0 : index
    %c18 = arith.constant 18 : index
    %65 = vector.load %arg9[%c0_58, %c18] : memref<10x290xf32, #tpu.memory_space<vmem>>, vector<8x256xf32>
    %c8_59 = arith.constant 8 : index
    %c18_60 = arith.constant 18 : index
    %66 = vector.load %arg9[%c8_59, %c18_60] : memref<10x290xf32, #tpu.memory_space<vmem>>, vector<2x256xf32>
    %67 = arith.mulf %65, %14 : vector<8x256xf32>
    %c40 = arith.constant 40 : index
    %c0_61 = arith.constant 0 : index
    %68 = vector.load %arg11[%c40, %c0_61] : memref<96x256xf32, #tpu.memory_space<vmem>>, vector<8x256xf32>
    tpu.vector_store %arg11[%c40, %c0_61], %67 {strides = array<i32>} : memref<96x256xf32, #tpu.memory_space<vmem>>, vector<8x256xf32>,
    %69 = arith.mulf %66, %18 : vector<2x256xf32>
    %c82 = arith.constant 82 : index
    %c0_62 = arith.constant 0 : index
    %70 = vector.load %arg11[%c82, %c0_62] : memref<96x256xf32, #tpu.memory_space<vmem>>, vector<2x256xf32>
    tpu.vector_store %arg11[%c82, %c0_62], %69 {strides = array<i32>} : memref<96x256xf32, #tpu.memory_space<vmem>>, vector<2x256xf32>,
    %c0_63 = arith.constant 0 : index
    %c32_64 = arith.constant 32 : index
    %71 = vector.load %arg9[%c0_63, %c32_64] : memref<10x290xf32, #tpu.memory_space<vmem>>, vector<8x256xf32>
    %c8_65 = arith.constant 8 : index
    %c32_66 = arith.constant 32 : index
    %72 = vector.load %arg9[%c8_65, %c32_66] : memref<10x290xf32, #tpu.memory_space<vmem>>, vector<2x256xf32>
    %73 = arith.mulf %71, %12 : vector<8x256xf32>
    %c48 = arith.constant 48 : index
    %c0_67 = arith.constant 0 : index
    %74 = vector.load %arg11[%c48, %c0_67] : memref<96x256xf32, #tpu.memory_space<vmem>>, vector<8x256xf32>
    tpu.vector_store %arg11[%c48, %c0_67], %73 {strides = array<i32>} : memref<96x256xf32, #tpu.memory_space<vmem>>, vector<8x256xf32>,
    %75 = arith.mulf %72, %16 : vector<2x256xf32>
    %c84 = arith.constant 84 : index
    %c0_68 = arith.constant 0 : index
    %76 = vector.load %arg11[%c84, %c0_68] : memref<96x256xf32, #tpu.memory_space<vmem>>, vector<2x256xf32>
    tpu.vector_store %arg11[%c84, %c0_68], %75 {strides = array<i32>} : memref<96x256xf32, #tpu.memory_space<vmem>>, vector<2x256xf32>,
    %c0_69 = arith.constant 0 : index
    %c33 = arith.constant 33 : index
    %77 = vector.load %arg9[%c0_69, %c33] : memref<10x290xf32, #tpu.memory_space<vmem>>, vector<8x256xf32>
    %c8_70 = arith.constant 8 : index
    %c33_71 = arith.constant 33 : index
    %78 = vector.load %arg9[%c8_70, %c33_71] : memref<10x290xf32, #tpu.memory_space<vmem>>, vector<2x256xf32>
    %c56 = arith.constant 56 : index
    %c0_72 = arith.constant 0 : index
    %79 = vector.load %arg11[%c56, %c0_72] : memref<96x256xf32, #tpu.memory_space<vmem>>, vector<8x256xf32>
    tpu.vector_store %arg11[%c56, %c0_72], %77 {strides = array<i32>} : memref<96x256xf32, #tpu.memory_space<vmem>>, vector<8x256xf32>,
    %c86 = arith.constant 86 : index
    %c0_73 = arith.constant 0 : index
    %80 = vector.load %arg11[%c86, %c0_73] : memref<96x256xf32, #tpu.memory_space<vmem>>, vector<2x256xf32>
    tpu.vector_store %arg11[%c86, %c0_73], %78 {strides = array<i32>} : memref<96x256xf32, #tpu.memory_space<vmem>>, vector<2x256xf32>,
    %c0_74 = arith.constant 0 : index
    %c34 = arith.constant 34 : index
    %81 = vector.load %arg9[%c0_74, %c34] : memref<10x290xf32, #tpu.memory_space<vmem>>, vector<8x256xf32>
    %c8_75 = arith.constant 8 : index
    %c34_76 = arith.constant 34 : index
    %82 = vector.load %arg9[%c8_75, %c34_76] : memref<10x290xf32, #tpu.memory_space<vmem>>, vector<2x256xf32>
    %83 = arith.mulf %81, %14 : vector<8x256xf32>
    %c64 = arith.constant 64 : index
    %c0_77 = arith.constant 0 : index
    %84 = vector.load %arg11[%c64, %c0_77] : memref<96x256xf32, #tpu.memory_space<vmem>>, vector<8x256xf32>
    tpu.vector_store %arg11[%c64, %c0_77], %83 {strides = array<i32>} : memref<96x256xf32, #tpu.memory_space<vmem>>, vector<8x256xf32>,
    %85 = arith.mulf %82, %18 : vector<2x256xf32>
    %c88 = arith.constant 88 : index
    %c0_78 = arith.constant 0 : index
    %86 = vector.load %arg11[%c88, %c0_78] : memref<96x256xf32, #tpu.memory_space<vmem>>, vector<2x256xf32>
    tpu.vector_store %arg11[%c88, %c0_78], %85 {strides = array<i32>} : memref<96x256xf32, #tpu.memory_space<vmem>>, vector<2x256xf32>,
    %c0_79 = arith.constant 0 : index
    %c0_80 = arith.constant 0 : index
    %87 = vector.load %arg11[%c0_79, %c0_80] : memref<96x256xf32, #tpu.memory_space<vmem>>, vector<96x256xf32>
    %cst_81 = arith.constant dense<0.000000e+00> : vector<8x256xf32>
    %88 = tpu.matmul %29, %87, %cst_81 {dimension_numbers = #tpu.dot_dimension_numbers<[1], [0], [0], [1], [0, 0, 1, 1], [], []>} : vector<8x96xf32>, vector<96x256xf32>, vector<8x256xf32> -> vector<8x256xf32>
    %89 = vector.broadcast %31 : vector<8x1xf32> to vector<8x256xf32>
    %90 = arith.addf %88, %89 : vector<8x256xf32>
    %cst_82 = arith.constant 0.000000e+00 : f32
    %91 = vector.broadcast %cst_82 : f32 to vector<8x256xf32>
    %92 = arith.maximumf %90, %91 : vector<8x256xf32>
    %93 = arith.addf %34, %92 : vector<8x256xf32>
    %c0_83 = arith.constant 0 : index
    %c0_84 = arith.constant 0 : index
    %c0_85 = arith.constant 0 : index
    %94 = vector.load %arg7[%c0_83, %c0_84, %c0_85] : memref<1x8x256xf32, #tpu.memory_space<vmem>>, vector<1x8x256xf32>
    %95 = vector.shape_cast %94 : vector<1x8x256xf32> to vector<8x256xf32>
    %96 = vector.shape_cast %93 : vector<8x256xf32> to vector<1x8x256xf32>
    tpu.vector_store %arg7[%c0_83, %c0_84, %c0_85], %96 {strides = array<i32>} : memref<1x8x256xf32, #tpu.memory_space<vmem>>, vector<1x8x256xf32>,
    %c0_86 = arith.constant 0 : index
    %c17_87 = arith.constant 17 : index
    %97 = vector.load %arg10[%c0_86, %c17_87] : memref<8x290xf32, #tpu.memory_space<vmem>>, vector<8x256xf32>
    tpu.vector_store %arg10[%c0_86, %c17_87], %93 {strides = array<i32>} : memref<8x290xf32, #tpu.memory_space<vmem>>, vector<8x256xf32>,
    %c0_88 = arith.constant 0 : index
    %c0_89 = arith.constant 0 : index
    %98 = vector.load %arg10[%c0_88, %c0_89] : memref<8x290xf32, #tpu.memory_space<vmem>>, vector<8x256xf32>
    %99 = arith.mulf %98, %12 : vector<8x256xf32>
    %c0_90 = arith.constant 0 : index
    %c0_91 = arith.constant 0 : index
    %100 = vector.load %arg11[%c0_90, %c0_91] : memref<96x256xf32, #tpu.memory_space<vmem>>, vector<8x256xf32>
    tpu.vector_store %arg11[%c0_90, %c0_91], %99 {strides = array<i32>} : memref<96x256xf32, #tpu.memory_space<vmem>>, vector<8x256xf32>,
    %c0_92 = arith.constant 0 : index
    %c1_93 = arith.constant 1 : index
    %101 = vector.load %arg10[%c0_92, %c1_93] : memref<8x290xf32, #tpu.memory_space<vmem>>, vector<8x256xf32>
    %c8_94 = arith.constant 8 : index
    %c0_95 = arith.constant 0 : index
    %102 = vector.load %arg11[%c8_94, %c0_95] : memref<96x256xf32, #tpu.memory_space<vmem>>, vector<8x256xf32>
    tpu.vector_store %arg11[%c8_94, %c0_95], %101 {strides = array<i32>} : memref<96x256xf32, #tpu.memory_space<vmem>>, vector<8x256xf32>,
    %c0_96 = arith.constant 0 : index
    %c2_97 = arith.constant 2 : index
    %103 = vector.load %arg10[%c0_96, %c2_97] : memref<8x290xf32, #tpu.memory_space<vmem>>, vector<8x256xf32>
    %104 = arith.mulf %103, %14 : vector<8x256xf32>
    %c16_98 = arith.constant 16 : index
    %c0_99 = arith.constant 0 : index
    %105 = vector.load %arg11[%c16_98, %c0_99] : memref<96x256xf32, #tpu.memory_space<vmem>>, vector<8x256xf32>
    tpu.vector_store %arg11[%c16_98, %c0_99], %104 {strides = array<i32>} : memref<96x256xf32, #tpu.memory_space<vmem>>, vector<8x256xf32>,
    %c0_100 = arith.constant 0 : index
    %c16_101 = arith.constant 16 : index
    %106 = vector.load %arg10[%c0_100, %c16_101] : memref<8x290xf32, #tpu.memory_space<vmem>>, vector<8x256xf32>
    %107 = arith.mulf %106, %12 : vector<8x256xf32>
    %c24_102 = arith.constant 24 : index
    %c0_103 = arith.constant 0 : index
    %108 = vector.load %arg11[%c24_102, %c0_103] : memref<96x256xf32, #tpu.memory_space<vmem>>, vector<8x256xf32>
    tpu.vector_store %arg11[%c24_102, %c0_103], %107 {strides = array<i32>} : memref<96x256xf32, #tpu.memory_space<vmem>>, vector<8x256xf32>,
    %c0_104 = arith.constant 0 : index
    %c17_105 = arith.constant 17 : index
    %109 = vector.load %arg10[%c0_104, %c17_105] : memref<8x290xf32, #tpu.memory_space<vmem>>, vector<8x256xf32>
    %c32_106 = arith.constant 32 : index
    %c0_107 = arith.constant 0 : index
    %110 = vector.load %arg11[%c32_106, %c0_107] : memref<96x256xf32, #tpu.memory_space<vmem>>, vector<8x256xf32>
    tpu.vector_store %arg11[%c32_106, %c0_107], %109 {strides = array<i32>} : memref<96x256xf32, #tpu.memory_space<vmem>>, vector<8x256xf32>,
    %c0_108 = arith.constant 0 : index
    %c18_109 = arith.constant 18 : index
    %111 = vector.load %arg10[%c0_108, %c18_109] : memref<8x290xf32, #tpu.memory_space<vmem>>, vector<8x256xf32>
    %112 = arith.mulf %111, %14 : vector<8x256xf32>
    %c40_110 = arith.constant 40 : index
    %c0_111 = arith.constant 0 : index
    %113 = vector.load %arg11[%c40_110, %c0_111] : memref<96x256xf32, #tpu.memory_space<vmem>>, vector<8x256xf32>
    tpu.vector_store %arg11[%c40_110, %c0_111], %112 {strides = array<i32>} : memref<96x256xf32, #tpu.memory_space<vmem>>, vector<8x256xf32>,
    %c0_112 = arith.constant 0 : index
    %c32_113 = arith.constant 32 : index
    %114 = vector.load %arg10[%c0_112, %c32_113] : memref<8x290xf32, #tpu.memory_space<vmem>>, vector<8x256xf32>
    %115 = arith.mulf %114, %12 : vector<8x256xf32>
    %c48_114 = arith.constant 48 : index
    %c0_115 = arith.constant 0 : index
    %116 = vector.load %arg11[%c48_114, %c0_115] : memref<96x256xf32, #tpu.memory_space<vmem>>, vector<8x256xf32>
    tpu.vector_store %arg11[%c48_114, %c0_115], %115 {strides = array<i32>} : memref<96x256xf32, #tpu.memory_space<vmem>>, vector<8x256xf32>,
    %c0_116 = arith.constant 0 : index
    %c33_117 = arith.constant 33 : index
    %117 = vector.load %arg10[%c0_116, %c33_117] : memref<8x290xf32, #tpu.memory_space<vmem>>, vector<8x256xf32>
    %c56_118 = arith.constant 56 : index
    %c0_119 = arith.constant 0 : index
    %118 = vector.load %arg11[%c56_118, %c0_119] : memref<96x256xf32, #tpu.memory_space<vmem>>, vector<8x256xf32>
    tpu.vector_store %arg11[%c56_118, %c0_119], %117 {strides = array<i32>} : memref<96x256xf32, #tpu.memory_space<vmem>>, vector<8x256xf32>,
    %c0_120 = arith.constant 0 : index
    %c34_121 = arith.constant 34 : index
    %119 = vector.load %arg10[%c0_120, %c34_121] : memref<8x290xf32, #tpu.memory_space<vmem>>, vector<8x256xf32>
    %120 = arith.mulf %119, %14 : vector<8x256xf32>
    %c64_122 = arith.constant 64 : index
    %c0_123 = arith.constant 0 : index
    %121 = vector.load %arg11[%c64_122, %c0_123] : memref<96x256xf32, #tpu.memory_space<vmem>>, vector<8x256xf32>
    tpu.vector_store %arg11[%c64_122, %c0_123], %120 {strides = array<i32>} : memref<96x256xf32, #tpu.memory_space<vmem>>, vector<8x256xf32>,
    %c0_124 = arith.constant 0 : index
    %c0_125 = arith.constant 0 : index
    %122 = vector.load %arg11[%c0_124, %c0_125] : memref<96x256xf32, #tpu.memory_space<vmem>>, vector<72x256xf32>
    %cst_126 = arith.constant dense<0.000000e+00> : vector<2x256xf32>
    %123 = tpu.matmul %30, %122, %cst_126 {dimension_numbers = #tpu.dot_dimension_numbers<[1], [0], [0], [1], [0, 0, 1, 1], [], []>} : vector<2x72xf32>, vector<72x256xf32>, vector<2x256xf32> -> vector<2x256xf32>
    %124 = arith.addf %36, %123 : vector<2x256xf32>
    %125 = vector.broadcast %32 : vector<1x1xf32> to vector<2x256xf32>
    %126 = arith.addf %124, %125 : vector<2x256xf32>
    %c0_127 = arith.constant 0 : index
    %c0_128 = arith.constant 0 : index
    %c0_129 = arith.constant 0 : index
    %127 = vector.load %arg8[%c0_127, %c0_128, %c0_129] : memref<1x2x256xf32, #tpu.memory_space<vmem>>, vector<1x2x256xf32>
    %128 = vector.shape_cast %127 : vector<1x2x256xf32> to vector<2x256xf32>
    %129 = vector.shape_cast %126 : vector<2x256xf32> to vector<1x2x256xf32>
    tpu.vector_store %arg8[%c0_127, %c0_128, %c0_129], %129 {strides = array<i32>} : memref<1x2x256xf32, #tpu.memory_space<vmem>>, vector<1x2x256xf32>,
    return
  }
  func.func @transform_0(%arg0: i32) -> (i32, i32, i32) {
    %c0_i32 = arith.constant 0 : i32
    %c0_i32_0 = arith.constant 0 : i32
    %c0_i32_1 = arith.constant 0 : i32
    return %arg0, %c0_i32, %c0_i32_0 : i32, i32, i32
  }
  func.func @transform_1(%arg0: i32) -> (i32, i32, i32) {
    %c0_i32 = arith.constant 0 : i32
    %c0_i32_0 = arith.constant 0 : i32
    %c0_i32_1 = arith.constant 0 : i32
    return %arg0, %c0_i32, %c0_i32_0 : i32, i32, i32
  }
  func.func @transform_2(%arg0: i32) -> (i32, i32) {
    %c0_i32 = arith.constant 0 : i32
    %c0_i32_0 = arith.constant 0 : i32
    %c0_i32_1 = arith.constant 0 : i32
    return %c0_i32, %c0_i32_0 : i32, i32
  }
  func.func @transform_3(%arg0: i32) -> (i32, i32) {
    %c0_i32 = arith.constant 0 : i32
    %c0_i32_0 = arith.constant 0 : i32
    %c0_i32_1 = arith.constant 0 : i32
    return %c0_i32, %c0_i32_0 : i32, i32
  }
  func.func @transform_4(%arg0: i32) -> (i32, i32) {
    %c0_i32 = arith.constant 0 : i32
    %c0_i32_0 = arith.constant 0 : i32
    %c0_i32_1 = arith.constant 0 : i32
    return %c0_i32, %c0_i32_0 : i32, i32
  }
  func.func @transform_5(%arg0: i32) -> (i32, i32) {
    %c0_i32 = arith.constant 0 : i32
    %c0_i32_0 = arith.constant 0 : i32
    %c0_i32_1 = arith.constant 0 : i32
    return %c0_i32, %c0_i32_0 : i32, i32
  }
  func.func @transform_6(%arg0: i32) -> (i32, i32, i32) {
    %c0_i32 = arith.constant 0 : i32
    %c0_i32_0 = arith.constant 0 : i32
    %c0_i32_1 = arith.constant 0 : i32
    return %arg0, %c0_i32, %c0_i32_0 : i32, i32, i32
  }
  func.func @transform_7(%arg0: i32) -> (i32, i32, i32) {
    %c0_i32 = arith.constant 0 : i32
    %c0_i32_0 = arith.constant 0 : i32
    %c0_i32_1 = arith.constant 0 : i32
    return %arg0, %c0_i32, %c0_i32_0 : i32, i32, i32
  }
}

</mosaic_0001>

<llo_original>
// kernel: tile.6
$region0: #{tile.6}
  #allocation0 [shape = 's32[1]{0}', space=sflag, size = 0x4, scoped, tag = 'scoped memory for tile.6']
  %s0 = inlined_call_operand.vmem [shape: f32[4], index: 0, kind: input, shape index: {}]
  %s1 = inlined_call_operand.vmem [shape: f32[2,1,1,4], index: 1, kind: output, shape index: {}]
  // Predicated region
  $region2: #{tile.6} parent=0 // pred_check
    _
  $region3: #{tile.6} parent=0 // pred_check_branch
    %3 = sbr.rel (0) target = $region5
  $region4: #{tile.6} parent=0 // pred_region
    _
  $region5: #{tile.6} parent=0 // pred_fallthru
    _
  %v4 = vld [vmem:[%s0] ss:$0 sm:$0xff]
  %5 = vst [vmem:[%s1] sm:$0x3] %v4

// kernel: tile.0
$region0: #{tile.0}
  %s0 = inlined_call_operand.vmem [shape: f32[2,1,1,4], index: 0, kind: input, shape index: {}]
  %s1 = inlined_call_operand.vmem [shape: f32[8,1], index: 1, kind: output, shape index: {}]
  $region1: #{tile.0} parent=0
    #allocation0 [shape = 'u8[4096]{0}', space=vmem, size = 0x1000, scoped, tag = 'scoped mem for input reshape']
    %s3 = sshll.u32 1, 2
    %s4 = ssub.s32 %s3, 1
    %v5 = vld [vmem:[%s0] sm:%s4]
    %6 = vst [vmem:[#allocation0] sm:%s4] %v5
    %v7 = vld [vmem:[#allocation0] sm:$0x3]
    %vm8 = vcmask 7168
    %9 = vst.msk [vmem:[%s1] ss:$4 sm:$0x3] %vm8, %v7
    %v10 = vld [vmem:[#allocation0] sm:$0x3]
    %11 = vrot.lane.b32.xlu0 %v10, 127
    %v12 = vpop.permute.xlu0 %11
    %vm13 = vcmask 7168
    %s14 = scalar_lea.vmem %s1, 1
    %15 = vst.msk [vmem:[%s14] ss:$4 sm:$0x3] %vm13, %v12
    %v16 = vld [vmem:[#allocation0] sm:$0x3]
    %17 = vrot.lane.b32.xlu0 %v16, 126
    %v18 = vpop.permute.xlu0 %17
    %vm19 = vcmask 7168
    %s20 = scalar_lea.vmem %s1, 2
    %21 = vst.msk [vmem:[%s20] ss:$4 sm:$0x3] %vm19, %v18
    %v22 = vld [vmem:[#allocation0] sm:$0x3]
    %23 = vrot.lane.b32.xlu0 %v22, 125
    %v24 = vpop.permute.xlu0 %23
    %vm25 = vcmask 7168
    %s26 = scalar_lea.vmem %s1, 3
    %27 = vst.msk [vmem:[%s26] ss:$4 sm:$0x3] %vm25, %v24

// kernel: gra_forward.1
$region0: #{gra_forward.1}
  #allocation0 [shape = 'u32[]', space=smem, size = 0x4, offset = 0x4, fixed_abs, tag = 'smem constant byte address 0x4 - core index']
  #allocation1 [shape = 'u32[144,128]{1,0:T(1,128)}', space=vmem, size = 0x12000, scoped, tag = 'internal scratch']
  #allocation2 [shape = 'f32[10,290]{1,0:T(8,128)}', space=vmem, size = 0x6000, scoped, tag = 'scratch operand']
  #allocation3 [shape = 'f32[8,290]{1,0:T(8,128)}', space=vmem, size = 0x3000, scoped, tag = 'scratch operand']
  #allocation4 [shape = 'f32[96,256]{1,0:T(8,128)}', space=vmem, size = 0x18000, scoped, tag = 'scratch operand']
  #allocation5 [shape = 'f32[1,1]{1,0:T(1,128)S(1)}', space=vmem, size = 0x200, scoped, tag = 'scoped memory for gra_forward.1']
  %s0 = inlined_call_operand.vmem [shape: f32[1,8,256], index: 0, kind: input, shape index: {}]
  %s1 = inlined_call_operand.vmem [shape: f32[1,2,256], index: 1, kind: input, shape index: {}]
  %s2 = inlined_call_operand.vmem [shape: f32[8,96], index: 2, kind: input, shape index: {}]
  %s3 = inlined_call_operand.vmem [shape: f32[8,1], index: 3, kind: input, shape index: {}]
  %s4 = inlined_call_operand.vmem [shape: f32[2,72], index: 4, kind: input, shape index: {}]
  %s5 = inlined_call_operand.<no memory space> [shape: f32[1,1], index: 5, kind: input, shape index: {}]
  %s6 = inlined_call_operand.vmem [shape: f32[1,8,256], index: 6, kind: output, shape index: {0}]
  %s7 = inlined_call_operand.vmem [shape: f32[1,2,256], index: 7, kind: output, shape index: {1}]
  %8 = xla_tuple %s6, %s7
  %s9 = sld [smem:[#allocation0]]
  $region42: #{gra_forward.1} parent=0
    _
  %s11 = ssub.s32 1, %s9
  %s12 = scalar_select 0, %s11, %s9
  %v13 = vstv %s5
  %14 = vst [vmem:[#allocation5] sm:$0x1] %v13
  // Predicated region
  $region2: #{gra_forward.1} parent=0 // pred_check
    _
  $region3: #{gra_forward.1} parent=0 // pred_check_branch
    %16 = sbr.rel (0) target = $region5
  $region4: #{gra_forward.1} parent=0 // pred_region
    _
  $region5: #{gra_forward.1} parent=0 // pred_fallthru
    _
  // Predicated region
  $region6: #{gra_forward.1} parent=0 // pred_check
    _
  $region7: #{gra_forward.1} parent=0 // pred_check_branch
    %18 = sbr.rel (0) target = $region9
  $region8: #{gra_forward.1} parent=0 // pred_region
    _
  $region9: #{gra_forward.1} parent=0 // pred_fallthru
    _
  // Predicated region
  $region10: #{gra_forward.1} parent=0 // pred_check
    _
  $region11: #{gra_forward.1} parent=0 // pred_check_branch
    %20 = sbr.rel (0) target = $region13
  $region12: #{gra_forward.1} parent=0 // pred_region
    _
  $region13: #{gra_forward.1} parent=0 // pred_fallthru
    _
  // Predicated region
  $region14: #{gra_forward.1} parent=0 // pred_check
    _
  $region15: #{gra_forward.1} parent=0 // pred_check_branch
    %22 = sbr.rel (0) target = $region17
  $region16: #{gra_forward.1} parent=0 // pred_region
    _
  $region17: #{gra_forward.1} parent=0 // pred_fallthru
    _
  // Predicated region
  $region18: #{gra_forward.1} parent=0 // pred_check
    _
  $region19: #{gra_forward.1} parent=0 // pred_check_branch
    %24 = sbr.rel (0) target = $region21
  $region20: #{gra_forward.1} parent=0 // pred_region
    _
  $region21: #{gra_forward.1} parent=0 // pred_fallthru
    _
  // Predicated region
  $region22: #{gra_forward.1} parent=0 // pred_check
    _
  $region23: #{gra_forward.1} parent=0 // pred_check_branch
    %26 = sbr.rel (0) target = $region25
  $region24: #{gra_forward.1} parent=0 // pred_region
    _
  $region25: #{gra_forward.1} parent=0 // pred_fallthru
    _
  %v27 = vlaneseq
  %v28 = vand.u32 %v27, 127
  %v29 = vadd.s32 %v28, 128
  %v30 = vand.u32 %v28, 15
  %v31 = vand.u32 %v29, 15
  %vm32 = vcmp.gt.s32.totalorder %v30, 0
  %vm33 = vcmp.gt.s32.totalorder %v31, 0
  %v34 = vsel %vm32, 1, 0
  %v35 = vsel %vm33, 1, 0
  %v36 = vcvt.s32.f32 %v34
  %v37 = vcvt.s32.f32 %v35
  %vm38 = vcmp.lt.s32.totalorder %v30, 15
  %vm39 = vcmp.lt.s32.totalorder %v31, 15
  %v40 = vsel %vm38, 1, 0
  %v41 = vsel %vm39, 1, 0
  %v42 = vcvt.s32.f32 %v40
  %v43 = vcvt.s32.f32 %v41
  %vm44 = vcmask 138240
  %45 = vst.msk [vmem:[#allocation2] sm:$0xff] %vm44, 0.0
  %vm46 = vcmask 132096
  %47 = vst.msk [vmem:[#allocation2 + $0x18] sm:$0x3] %vm46, 0.0
  %vm48 = vcmask 277640
  %49 = vst.msk [vmem:[#allocation2 + $0x10] sm:$0xff] %vm48, 0.0
  %vm50 = vcmask 271496
  %51 = vst.msk [vmem:[#allocation2 + $0x28] sm:$0x3] %vm50, 0.0
  %52 = vst.msk [vmem:[#allocation3] sm:$0xff] %vm44, 0.0
  %53 = vst.msk [vmem:[#allocation3 + $0x10] sm:$0xff] %vm48, 0.0
  %54 = vst [vmem:[#allocation4 + $0xb0] sm:$0xfc] 0.0
  %55 = vst [vmem:[#allocation4 + $0xb8] sm:$0xfc] 0.0
  %v56 = vld [vmem:[%s2] sm:$0xff]
  %v57 = vld [vmem:[%s4] sm:$0x3]
  %v58 = vld [vmem:[%s3] sm:$0xff]
  %v59 = vld [vmem:[#allocation5] sm:$0x1]
  %v60 = vld [vmem:[%s0] sm:$0xff]
  %v61 = vld [vmem:[%s0 + $0x8] sm:$0xff]
  %v62 = vld [vmem:[%s1] sm:$0xf]
  %65 = vrot.lane.b32.xlu0 %v60, 17
  %v66 = vpop.permute.xlu0 %65
  %67 = vrot.lane.b32.xlu0 %v61, 17
  %v68 = vpop.permute.xlu0 %67
  %v69 = vsel %vm44, %v66, %v68
  %vm73 = vcmask 1047688
  %74 = vst.msk [vmem:[#allocation2] sm:$0xff] %vm73, %v66
  %75 = vst [vmem:[#allocation2 + $0x8] sm:$0xff] %v69
  %76 = vst.msk [vmem:[#allocation2 + $0x10] sm:$0xff] %vm44, %v68
  %v79 = vunpack.c.l.s4 1983009808
  %v80 = vunpack.c.0.s8 %v79
  %v81 = vlaneseq
  %v82 = vshrl.u32 %v81, 7
  %v83 = vsub.s32 %v80, %v82
  %v84 = vrot.slane %v62, %v83
  %v85 = vcombine.high %v84, %v84
  %86 = vrot.lane.b32.xlu0 %v84, 17
  %v87 = vpop.permute.xlu0 %86
  %88 = vrot.lane.b32.xlu0 %v85, 17
  %v89 = vpop.permute.xlu0 %88
  %v90 = vsel %vm44, %v87, %v89
  %vm94 = vcmask 1041544
  %95 = vst.msk [vmem:[#allocation2 + $0x18] sm:$0x3] %vm94, %v87
  %96 = vst [vmem:[#allocation2 + $0x20] sm:$0x3] %v90
  %97 = vst.msk [vmem:[#allocation2 + $0x28] sm:$0x3] %vm46, %v89
  %v98 = vld [vmem:[#allocation2] sm:$0xff]
  %v99 = vld [vmem:[#allocation2 + $0x8] sm:$0xff]
  %v100 = vld [vmem:[#allocation2 + $0x18] sm:$0x3]
  %v101 = vld [vmem:[#allocation2 + $0x20] sm:$0x3]
  %v102 = vmul.f32 %v98, %v36
  %v103 = vmul.f32 %v99, %v37
  %104 = vst [vmem:[#allocation4] sm:$0xff] %v102
  %105 = vst [vmem:[#allocation4 + $0x8] sm:$0xff] %v103
  %v106 = vmul.f32 %v100, %v36
  %v107 = vmul.f32 %v101, %v37
  %108 = vst [vmem:[#allocation4 + $0x90] sm:$0x3] %v106
  %109 = vst [vmem:[#allocation4 + $0x98] sm:$0x3] %v107
  %v110 = vld [vmem:[#allocation2] sm:$0xff]
  %v111 = vld [vmem:[#allocation2 + $0x8] sm:$0xff]
  %v112 = vld [vmem:[#allocation2 + $0x10] sm:$0xff]
  %v113 = vld [vmem:[#allocation2 + $0x18] sm:$0x3]
  %v114 = vld [vmem:[#allocation2 + $0x20] sm:$0x3]
  %v115 = vld [vmem:[#allocation2 + $0x28] sm:$0x3]
  %119 = vrot.lane.b32.xlu0 %v110, 127
  %v120 = vpop.permute.xlu0 %119
  %121 = vrot.lane.b32.xlu0 %v111, 127
  %v122 = vpop.permute.xlu0 %121
  %123 = vrot.lane.b32.xlu0 %v112, 127
  %v124 = vpop.permute.xlu0 %123
  %vm125 = vcmask 1039360
  %v126 = vsel %vm125, %v120, %v122
  %v127 = vsel %vm125, %v122, %v124
  %130 = vst [vmem:[#allocation4 + $0x10] sm:$0xff] %v126
  %131 = vst [vmem:[#allocation4 + $0x18] sm:$0xff] %v127
  %v135 = vrot.slane %v113, 6
  %v136 = vrot.slane %v114, 6
  %v137 = vrot.slane %v115, 6
  %138 = vrot.lane.b32.xlu0 %v135, 127
  %v139 = vpop.permute.xlu0 %138
  %140 = vrot.lane.b32.xlu0 %v136, 127
  %v141 = vpop.permute.xlu0 %140
  %142 = vrot.lane.b32.xlu0 %v137, 127
  %v143 = vpop.permute.xlu0 %142
  %v144 = vsel %vm125, %v139, %v141
  %v145 = vsel %vm125, %v141, %v143
  %148 = vst [vmem:[#allocation4 + $0x90] sm:$0xc] %v144
  %149 = vst [vmem:[#allocation4 + $0x98] sm:$0xc] %v145
  %v150 = vld [vmem:[#allocation2] sm:$0xff]
  %v151 = vld [vmem:[#allocation2 + $0x8] sm:$0xff]
  %v152 = vld [vmem:[#allocation2 + $0x10] sm:$0xff]
  %v153 = vld [vmem:[#allocation2 + $0x18] sm:$0x3]
  %v154 = vld [vmem:[#allocation2 + $0x20] sm:$0x3]
  %v155 = vld [vmem:[#allocation2 + $0x28] sm:$0x3]
  %158 = vrot.lane.b32.xlu0 %v42, 2
  %v159 = vpop.permute.xlu0 %158
  %160 = vrot.lane.b32.xlu0 %v43, 2
  %v161 = vpop.permute.xlu0 %160
  %vm162 = vcmask 15360
  %v163 = vsel %vm162, %v159, %v161
  %v167 = vmul.f32 %v150, %v159
  %v168 = vmul.f32 %v151, %v163
  %v169 = vmul.f32 %v152, %v161
  %173 = vrot.lane.b32.xlu0 %v167, 126
  %v174 = vpop.permute.xlu0 %173
  %175 = vrot.lane.b32.xlu0 %v168, 126
  %v176 = vpop.permute.xlu0 %175
  %177 = vrot.lane.b32.xlu0 %v169, 126
  %v178 = vpop.permute.xlu0 %177
  %vm179 = vcmask 1031168
  %v180 = vsel %vm179, %v174, %v176
  %v181 = vsel %vm179, %v176, %v178
  %184 = vst [vmem:[#allocation4 + $0x20] sm:$0xff] %v180
  %185 = vst [vmem:[#allocation4 + $0x28] sm:$0xff] %v181
  %v186 = vmul.f32 %v153, %v159
  %v187 = vmul.f32 %v154, %v163
  %v188 = vmul.f32 %v155, %v161
  %v192 = vrot.slane %v186, 4
  %v193 = vrot.slane %v187, 4
  %v194 = vrot.slane %v188, 4
  %195 = vrot.lane.b32.xlu0 %v192, 126
  %v196 = vpop.permute.xlu0 %195
  %197 = vrot.lane.b32.xlu0 %v193, 126
  %v198 = vpop.permute.xlu0 %197
  %199 = vrot.lane.b32.xlu0 %v194, 126
  %v200 = vpop.permute.xlu0 %199
  %v201 = vsel %vm179, %v196, %v198
  %v202 = vsel %vm179, %v198, %v200
  %205 = vst [vmem:[#allocation4 + $0x90] sm:$0x30] %v201
  %206 = vst [vmem:[#allocation4 + $0x98] sm:$0x30] %v202
  %v207 = vld [vmem:[#allocation2] sm:$0xff]
  %v208 = vld [vmem:[#allocation2 + $0x8] sm:$0xff]
  %v209 = vld [vmem:[#allocation2 + $0x10] sm:$0xff]
  %v210 = vld [vmem:[#allocation2 + $0x18] sm:$0x3]
  %v211 = vld [vmem:[#allocation2 + $0x20] sm:$0x3]
  %v212 = vld [vmem:[#allocation2 + $0x28] sm:$0x3]
  %215 = vrot.lane.b32.xlu0 %v36, 16
  %v216 = vpop.permute.xlu0 %215
  %217 = vrot.lane.b32.xlu0 %v37, 16
  %v218 = vpop.permute.xlu0 %217
  %vm219 = vcmask 130048
  %v220 = vsel %vm219, %v216, %v218
  %v224 = vmul.f32 %v207, %v216
  %v225 = vmul.f32 %v208, %v220
  %v226 = vmul.f32 %v209, %v218
  %230 = vrot.lane.b32.xlu0 %v224, 112
  %v231 = vpop.permute.xlu0 %230
  %232 = vrot.lane.b32.xlu0 %v225, 112
  %v233 = vpop.permute.xlu0 %232
  %234 = vrot.lane.b32.xlu0 %v226, 112
  %v235 = vpop.permute.xlu0 %234
  %vm236 = vcmask 916480
  %v237 = vsel %vm236, %v231, %v233
  %v238 = vsel %vm236, %v233, %v235
  %241 = vst [vmem:[#allocation4 + $0x30] sm:$0xff] %v237
  %242 = vst [vmem:[#allocation4 + $0x38] sm:$0xff] %v238
  %v243 = vmul.f32 %v210, %v216
  %v244 = vmul.f32 %v211, %v220
  %v245 = vmul.f32 %v212, %v218
  %v249 = vrot.slane %v243, 2
  %v250 = vrot.slane %v244, 2
  %v251 = vrot.slane %v245, 2
  %252 = vrot.lane.b32.xlu0 %v249, 112
  %v253 = vpop.permute.xlu0 %252
  %254 = vrot.lane.b32.xlu0 %v250, 112
  %v255 = vpop.permute.xlu0 %254
  %256 = vrot.lane.b32.xlu0 %v251, 112
  %v257 = vpop.permute.xlu0 %256
  %v258 = vsel %vm236, %v253, %v255
  %v259 = vsel %vm236, %v255, %v257
  %262 = vst [vmem:[#allocation4 + $0x90] sm:$0xc0] %v258
  %263 = vst [vmem:[#allocation4 + $0x98] sm:$0xc0] %v259
  %v264 = vld [vmem:[#allocation2] sm:$0xff]
  %v265 = vld [vmem:[#allocation2 + $0x8] sm:$0xff]
  %v266 = vld [vmem:[#allocation2 + $0x10] sm:$0xff]
  %v267 = vld [vmem:[#allocation2 + $0x18] sm:$0x3]
  %v268 = vld [vmem:[#allocation2 + $0x20] sm:$0x3]
  %v269 = vld [vmem:[#allocation2 + $0x28] sm:$0x3]
  %273 = vrot.lane.b32.xlu0 %v264, 111
  %v274 = vpop.permute.xlu0 %273
  %275 = vrot.lane.b32.xlu0 %v265, 111
  %v276 = vpop.permute.xlu0 %275
  %277 = vrot.lane.b32.xlu0 %v266, 111
  %v278 = vpop.permute.xlu0 %277
  %vm279 = vcmask 908288
  %v280 = vsel %vm279, %v274, %v276
  %v281 = vsel %vm279, %v276, %v278
  %284 = vst [vmem:[#allocation4 + $0x40] sm:$0xff] %v280
  %285 = vst [vmem:[#allocation4 + $0x48] sm:$0xff] %v281
  %289 = vrot.lane.b32.xlu0 %v267, 111
  %v290 = vpop.permute.xlu0 %289
  %291 = vrot.lane.b32.xlu0 %v268, 111
  %v292 = vpop.permute.xlu0 %291
  %293 = vrot.lane.b32.xlu0 %v269, 111
  %v294 = vpop.permute.xlu0 %293
  %v295 = vsel %vm279, %v290, %v292
  %v296 = vsel %vm279, %v292, %v294
  %299 = vst [vmem:[#allocation4 + $0xa0] sm:$0x3] %v295
  %300 = vst [vmem:[#allocation4 + $0xa8] sm:$0x3] %v296
  %v301 = vld [vmem:[#allocation2] sm:$0xff]
  %v302 = vld [vmem:[#allocation2 + $0x8] sm:$0xff]
  %v303 = vld [vmem:[#allocation2 + $0x10] sm:$0xff]
  %v304 = vld [vmem:[#allocation2 + $0x18] sm:$0x3]
  %v305 = vld [vmem:[#allocation2 + $0x20] sm:$0x3]
  %v306 = vld [vmem:[#allocation2 + $0x28] sm:$0x3]
  %307 = vrot.lane.b32.xlu0 %v42, 18
  %v308 = vpop.permute.xlu0 %307
  %309 = vrot.lane.b32.xlu0 %v43, 18
  %v310 = vpop.permute.xlu0 %309
  %vm311 = vcmask 146432
  %v312 = vsel %vm311, %v308, %v310
  %v316 = vmul.f32 %v301, %v308
  %v317 = vmul.f32 %v302, %v312
  %v318 = vmul.f32 %v303, %v310
  %322 = vrot.lane.b32.xlu0 %v316, 110
  %v323 = vpop.permute.xlu0 %322
  %324 = vrot.lane.b32.xlu0 %v317, 110
  %v325 = vpop.permute.xlu0 %324
  %326 = vrot.lane.b32.xlu0 %v318, 110
  %v327 = vpop.permute.xlu0 %326
  %vm328 = vcmask 900096
  %v329 = vsel %vm328, %v323, %v325
  %v330 = vsel %vm328, %v325, %v327
  %333 = vst [vmem:[#allocation4 + $0x50] sm:$0xff] %v329
  %334 = vst [vmem:[#allocation4 + $0x58] sm:$0xff] %v330
  %v335 = vmul.f32 %v304, %v308
  %v336 = vmul.f32 %v305, %v312
  %v337 = vmul.f32 %v306, %v310
  %v341 = vrot.slane %v335, 6
  %v342 = vrot.slane %v336, 6
  %v343 = vrot.slane %v337, 6
  %344 = vrot.lane.b32.xlu0 %v341, 110
  %v345 = vpop.permute.xlu0 %344
  %346 = vrot.lane.b32.xlu0 %v342, 110
  %v347 = vpop.permute.xlu0 %346
  %348 = vrot.lane.b32.xlu0 %v343, 110
  %v349 = vpop.permute.xlu0 %348
  %v350 = vsel %vm328, %v345, %v347
  %v351 = vsel %vm328, %v347, %v349
  %354 = vst [vmem:[#allocation4 + $0xa0] sm:$0xc] %v350
  %355 = vst [vmem:[#allocation4 + $0xa8] sm:$0xc] %v351
  %v356 = vld [vmem:[#allocation2] sm:$0xff]
  %v357 = vld [vmem:[#allocation2 + $0x8] sm:$0xff]
  %v358 = vld [vmem:[#allocation2 + $0x10] sm:$0xff]
  %v359 = vld [vmem:[#allocation2 + $0x18] sm:$0x3]
  %v360 = vld [vmem:[#allocation2 + $0x20] sm:$0x3]
  %v361 = vld [vmem:[#allocation2 + $0x28] sm:$0x3]
  %362 = vrot.lane.b32.xlu0 %v36, 32
  %v363 = vpop.permute.xlu0 %362
  %364 = vrot.lane.b32.xlu0 %v37, 32
  %v365 = vpop.permute.xlu0 %364
  %vm366 = vcmask 261120
  %v367 = vsel %vm366, %v363, %v365
  %v371 = vmul.f32 %v356, %v363
  %v372 = vmul.f32 %v357, %v367
  %v373 = vmul.f32 %v358, %v365
  %377 = vrot.lane.b32.xlu0 %v371, 96
  %v378 = vpop.permute.xlu0 %377
  %379 = vrot.lane.b32.xlu0 %v372, 96
  %v380 = vpop.permute.xlu0 %379
  %381 = vrot.lane.b32.xlu0 %v373, 96
  %v382 = vpop.permute.xlu0 %381
  %vm383 = vcmask 785408
  %v384 = vsel %vm383, %v378, %v380
  %v385 = vsel %vm383, %v380, %v382
  %388 = vst [vmem:[#allocation4 + $0x60] sm:$0xff] %v384
  %389 = vst [vmem:[#allocation4 + $0x68] sm:$0xff] %v385
  %v390 = vmul.f32 %v359, %v363
  %v391 = vmul.f32 %v360, %v367
  %v392 = vmul.f32 %v361, %v365
  %v396 = vrot.slane %v390, 4
  %v397 = vrot.slane %v391, 4
  %v398 = vrot.slane %v392, 4
  %399 = vrot.lane.b32.xlu0 %v396, 96
  %v400 = vpop.permute.xlu0 %399
  %401 = vrot.lane.b32.xlu0 %v397, 96
  %v402 = vpop.permute.xlu0 %401
  %403 = vrot.lane.b32.xlu0 %v398, 96
  %v404 = vpop.permute.xlu0 %403
  %v405 = vsel %vm383, %v400, %v402
  %v406 = vsel %vm383, %v402, %v404
  %409 = vst [vmem:[#allocation4 + $0xa0] sm:$0x30] %v405
  %410 = vst [vmem:[#allocation4 + $0xa8] sm:$0x30] %v406
  %v411 = vld [vmem:[#allocation2] sm:$0xff]
  %v412 = vld [vmem:[#allocation2 + $0x8] sm:$0xff]
  %v413 = vld [vmem:[#allocation2 + $0x10] sm:$0xff]
  %v414 = vld [vmem:[#allocation2 + $0x18] sm:$0x3]
  %v415 = vld [vmem:[#allocation2 + $0x20] sm:$0x3]
  %v416 = vld [vmem:[#allocation2 + $0x28] sm:$0x3]
  %420 = vrot.lane.b32.xlu0 %v411, 95
  %v421 = vpop.permute.xlu0 %420
  %422 = vrot.lane.b32.xlu0 %v412, 95
  %v423 = vpop.permute.xlu0 %422
  %424 = vrot.lane.b32.xlu0 %v413, 95
  %v425 = vpop.permute.xlu0 %424
  %vm426 = vcmask 777216
  %v427 = vsel %vm426, %v421, %v423
  %v428 = vsel %vm426, %v423, %v425
  %431 = vst [vmem:[#allocation4 + $0x70] sm:$0xff] %v427
  %432 = vst [vmem:[#allocation4 + $0x78] sm:$0xff] %v428
  %v436 = vrot.slane %v414, 2
  %v437 = vrot.slane %v415, 2
  %v438 = vrot.slane %v416, 2
  %439 = vrot.lane.b32.xlu0 %v436, 95
  %v440 = vpop.permute.xlu0 %439
  %441 = vrot.lane.b32.xlu0 %v437, 95
  %v442 = vpop.permute.xlu0 %441
  %443 = vrot.lane.b32.xlu0 %v438, 95
  %v444 = vpop.permute.xlu0 %443
  %v445 = vsel %vm426, %v440, %v442
  %v446 = vsel %vm426, %v442, %v444
  %449 = vst [vmem:[#allocation4 + $0xa0] sm:$0xc0] %v445
  %450 = vst [vmem:[#allocation4 + $0xa8] sm:$0xc0] %v446
  %v451 = vld [vmem:[#allocation2] sm:$0xff]
  %v452 = vld [vmem:[#allocation2 + $0x8] sm:$0xff]
  %v453 = vld [vmem:[#allocation2 + $0x10] sm:$0xff]
  %v454 = vld [vmem:[#allocation2 + $0x18] sm:$0x3]
  %v455 = vld [vmem:[#allocation2 + $0x20] sm:$0x3]
  %v456 = vld [vmem:[#allocation2 + $0x28] sm:$0x3]
  %457 = vrot.lane.b32.xlu0 %v42, 34
  %v458 = vpop.permute.xlu0 %457
  %459 = vrot.lane.b32.xlu0 %v43, 34
  %v460 = vpop.permute.xlu0 %459
  %vm461 = vcmask 277504
  %v462 = vsel %vm461, %v458, %v460
  %v466 = vmul.f32 %v451, %v458
  %v467 = vmul.f32 %v452, %v462
  %v468 = vmul.f32 %v453, %v460
  %472 = vrot.lane.b32.xlu0 %v466, 94
  %v473 = vpop.permute.xlu0 %472
  %474 = vrot.lane.b32.xlu0 %v467, 94
  %v475 = vpop.permute.xlu0 %474
  %476 = vrot.lane.b32.xlu0 %v468, 94
  %v477 = vpop.permute.xlu0 %476
  %vm478 = vcmask 769024
  %v479 = vsel %vm478, %v473, %v475
  %v480 = vsel %vm478, %v475, %v477
  %483 = vst [vmem:[#allocation4 + $0x80] sm:$0xff] %v479
  %484 = vst [vmem:[#allocation4 + $0x88] sm:$0xff] %v480
  %v485 = vmul.f32 %v454, %v458
  %v486 = vmul.f32 %v455, %v462
  %v487 = vmul.f32 %v456, %v460
  %491 = vrot.lane.b32.xlu0 %v485, 94
  %v492 = vpop.permute.xlu0 %491
  %493 = vrot.lane.b32.xlu0 %v486, 94
  %v494 = vpop.permute.xlu0 %493
  %495 = vrot.lane.b32.xlu0 %v487, 94
  %v496 = vpop.permute.xlu0 %495
  %v497 = vsel %vm478, %v492, %v494
  %v498 = vsel %vm478, %v494, %v496
  %501 = vst [vmem:[#allocation4 + $0xb0] sm:$0x3] %v497
  %502 = vst [vmem:[#allocation4 + $0xb8] sm:$0x3] %v498
  %v503 = vld [vmem:[#allocation4] sm:$0xff]
  %v504 = vld [vmem:[#allocation4 + $0x8] sm:$0xff]
  %v505 = vld [vmem:[#allocation4 + $0x10] sm:$0xff]
  %v506 = vld [vmem:[#allocation4 + $0x18] sm:$0xff]
  %v507 = vld [vmem:[#allocation4 + $0x20] sm:$0xff]
  %v508 = vld [vmem:[#allocation4 + $0x28] sm:$0xff]
  %v509 = vld [vmem:[#allocation4 + $0x30] sm:$0xff]
  %v510 = vld [vmem:[#allocation4 + $0x38] sm:$0xff]
  %v511 = vld [vmem:[#allocation4 + $0x40] sm:$0xff]
  %v512 = vld [vmem:[#allocation4 + $0x48] sm:$0xff]
  %v513 = vld [vmem:[#allocation4 + $0x50] sm:$0xff]
  %v514 = vld [vmem:[#allocation4 + $0x58] sm:$0xff]
  %v515 = vld [vmem:[#allocation4 + $0x60] sm:$0xff]
  %v516 = vld [vmem:[#allocation4 + $0x68] sm:$0xff]
  %v517 = vld [vmem:[#allocation4 + $0x70] sm:$0xff]
  %v518 = vld [vmem:[#allocation4 + $0x78] sm:$0xff]
  %v519 = vld [vmem:[#allocation4 + $0x80] sm:$0xff]
  %v520 = vld [vmem:[#allocation4 + $0x88] sm:$0xff]
  %v521 = vld [vmem:[#allocation4 + $0x90] sm:$0xff]
  %v522 = vld [vmem:[#allocation4 + $0x98] sm:$0xff]
  %v523 = vld [vmem:[#allocation4 + $0xa0] sm:$0xff]
  %v524 = vld [vmem:[#allocation4 + $0xa8] sm:$0xff]
  %v525 = vld [vmem:[#allocation4 + $0xb0] sm:$0xff]
  %v526 = vld [vmem:[#allocation4 + $0xb8] sm:$0xff]
  %528 = vset.pattern.permute.xlu0 0
  %529 = vperm.xlu0 %528, %v58
  %v530 = vpop.permute.xlu0 %529
  %v533 = vsel %vm383, %v56, 0
  %535 = vmatprep.subr.mxu0 0.0
  %536 = vmatpush1.msra.mxu0 0.0
  %537 = vmatprep.subr.mxu0 0.0
  %538 = vmatpush1.msra.mxu0 0.0
  %539 = vmatprep.subr.mxu0 0.0
  %540 = vmatpush1.msra.mxu0 0.0
  %541 = vmatprep.subr.mxu0 0.0
  %542 = vmatpush1.msra.mxu0 0.0
  %543 = vmatprep.subr.mxu0 %v526
  %544 = vmatpush1.msra.mxu0 %v525
  %545 = vmatprep.subr.mxu0 %v524
  %546 = vmatpush1.msra.mxu0 %v523
  %547 = vmatprep.subr.mxu0 %v522
  %548 = vmatpush1.msra.mxu0 %v521
  %549 = vmatprep.subr.mxu0 %v520
  %550 = vmatpush1.msra.mxu0 %v519
  %551 = vmatprep.subr.mxu0 %v518
  %552 = vmatpush1.msra.mxu0 %v517
  %553 = vmatprep.subr.mxu0 %v516
  %554 = vmatpush1.msra.mxu0 %v515
  %555 = vmatprep.subr.mxu0 %v514
  %556 = vmatpush1.msra.mxu0 %v513
  %557 = vmatprep.subr.mxu0 %v512
  %558 = vmatpush1.msra.mxu0 %v511
  %559 = vmatprep.subr.mxu0 %v510
  %560 = vmatpush1.msra.mxu0 %v509
  %561 = vmatprep.subr.mxu0 %v508
  %562 = vmatpush1.msra.mxu0 %v507
  %563 = vmatprep.subr.mxu0 %v506
  %564 = vmatpush1.msra.mxu0 %v505
  %565 = vmatprep.subr.mxu0 %v504
  %566 = vmatpush1.msra.mxu0 %v503
  %567 = vmatprep.subr.mxu0 0.0
  %568 = vmatpush2.msra.mxu0 0.0
  %569 = vmatprep.subr.mxu0 0.0
  %570 = vmatpush2.msra.mxu0 0.0
  %571 = vmatprep.subr.mxu0 0.0
  %572 = vmatpush2.msra.mxu0 0.0
  %573 = vmatprep.subr.mxu0 0.0
  %574 = vmatpush2.msra.mxu0 0.0
  %575 = vmatprep.subr.mxu0 0.0
  %576 = vmatpush2.msra.mxu0 0.0
  %577 = vmatprep.subr.mxu0 0.0
  %578 = vmatpush2.msra.mxu0 0.0
  %579 = vmatprep.subr.mxu0 0.0
  %580 = vmatpush2.msra.mxu0 0.0
  %581 = vmatprep.subr.mxu0 0.0
  %582 = vmatpush2.msra.mxu0 0.0
  %583 = vmatprep.subr.mxu0 0.0
  %584 = vmatpush2.msra.mxu0 0.0
  %585 = vmatprep.subr.mxu0 0.0
  %586 = vmatpush2.msra.mxu0 0.0
  %587 = vmatprep.subr.mxu0 0.0
  %588 = vmatpush2.msra.mxu0 0.0
  %589 = vmatprep.subr.mxu0 0.0
  %590 = vmatpush2.msra.mxu0 0.0
  %591 = vmatprep.subr.mxu0 0.0
  %592 = vmatpush2.msra.mxu0 0.0
  %593 = vmatprep.subr.mxu0 0.0
  %594 = vmatpush2.msra.mxu0 0.0
  %595 = vmatprep.subr.mxu0 0.0
  %596 = vmatpush2.msra.mxu0 0.0
  %597 = vmatprep.subr.mxu0 0.0
  %598 = vmatpush2.msra.mxu0 0.0
  %599 = vmatprep.mubr.f32.mxu0 0.0
  %600 = vmatmul.mubr.f32.gmra.mxu0 %v533
  %v601 = vpop.f32.mrf.mxu0
  %v602 = vadd.f32 %v530, %v601
  %v603 = vpop.f32.mrf.mxu0
  %v604 = vadd.f32 %v530, %v603
  %605 = vdwg.mxu0
  %v606 = vmax.f32 %v602, 0.0
  %v607 = vmax.f32 %v604, 0.0
  %v608 = vadd.f32 %v60, %v606
  %v609 = vadd.f32 %v61, %v607
  %610 = vst [vmem:[%s6] sm:$0xff] %v608
  %611 = vst [vmem:[%s6 + $0x8] sm:$0xff] %v609
  %614 = vrot.lane.b32.xlu0 %v608, 17
  %v615 = vpop.permute.xlu0 %614
  %616 = vrot.lane.b32.xlu0 %v609, 17
  %v617 = vpop.permute.xlu0 %616
  %v618 = vsel %vm44, %v615, %v617
  %622 = vst.msk [vmem:[#allocation3] sm:$0xff] %vm73, %v615
  %623 = vst [vmem:[#allocation3 + $0x8] sm:$0xff] %v618
  %624 = vst.msk [vmem:[#allocation3 + $0x10] sm:$0xff] %vm44, %v617
  %v625 = vld [vmem:[#allocation3] sm:$0xff]
  %v626 = vld [vmem:[#allocation3 + $0x8] sm:$0xff]
  %v627 = vmul.f32 %v625, %v36
  %v628 = vmul.f32 %v626, %v37
  %629 = vst [vmem:[#allocation4] sm:$0xff] %v627
  %630 = vst [vmem:[#allocation4 + $0x8] sm:$0xff] %v628
  %v631 = vld [vmem:[#allocation3] sm:$0xff]
  %v632 = vld [vmem:[#allocation3 + $0x8] sm:$0xff]
  %v633 = vld [vmem:[#allocation3 + $0x10] sm:$0xff]
  %637 = vrot.lane.b32.xlu0 %v631, 127
  %v638 = vpop.permute.xlu0 %637
  %639 = vrot.lane.b32.xlu0 %v632, 127
  %v640 = vpop.permute.xlu0 %639
  %641 = vrot.lane.b32.xlu0 %v633, 127
  %v642 = vpop.permute.xlu0 %641
  %v643 = vsel %vm125, %v638, %v640
  %v644 = vsel %vm125, %v640, %v642
  %647 = vst [vmem:[#allocation4 + $0x10] sm:$0xff] %v643
  %648 = vst [vmem:[#allocation4 + $0x18] sm:$0xff] %v644
  %v649 = vld [vmem:[#allocation3] sm:$0xff]
  %v650 = vld [vmem:[#allocation3 + $0x8] sm:$0xff]
  %v651 = vld [vmem:[#allocation3 + $0x10] sm:$0xff]
  %v652 = vmul.f32 %v649, %v159
  %v653 = vmul.f32 %v650, %v163
  %v654 = vmul.f32 %v651, %v161
  %658 = vrot.lane.b32.xlu0 %v652, 126
  %v659 = vpop.permute.xlu0 %658
  %660 = vrot.lane.b32.xlu0 %v653, 126
  %v661 = vpop.permute.xlu0 %660
  %662 = vrot.lane.b32.xlu0 %v654, 126
  %v663 = vpop.permute.xlu0 %662
  %v664 = vsel %vm179, %v659, %v661
  %v665 = vsel %vm179, %v661, %v663
  %668 = vst [vmem:[#allocation4 + $0x20] sm:$0xff] %v664
  %669 = vst [vmem:[#allocation4 + $0x28] sm:$0xff] %v665
  %v670 = vld [vmem:[#allocation3] sm:$0xff]
  %v671 = vld [vmem:[#allocation3 + $0x8] sm:$0xff]
  %v672 = vld [vmem:[#allocation3 + $0x10] sm:$0xff]
  %v673 = vmul.f32 %v670, %v216
  %v674 = vmul.f32 %v671, %v220
  %v675 = vmul.f32 %v672, %v218
  %679 = vrot.lane.b32.xlu0 %v673, 112
  %v680 = vpop.permute.xlu0 %679
  %681 = vrot.lane.b32.xlu0 %v674, 112
  %v682 = vpop.permute.xlu0 %681
  %683 = vrot.lane.b32.xlu0 %v675, 112
  %v684 = vpop.permute.xlu0 %683
  %v685 = vsel %vm236, %v680, %v682
  %v686 = vsel %vm236, %v682, %v684
  %689 = vst [vmem:[#allocation4 + $0x30] sm:$0xff] %v685
  %690 = vst [vmem:[#allocation4 + $0x38] sm:$0xff] %v686
  %v691 = vld [vmem:[#allocation3] sm:$0xff]
  %v692 = vld [vmem:[#allocation3 + $0x8] sm:$0xff]
  %v693 = vld [vmem:[#allocation3 + $0x10] sm:$0xff]
  %697 = vrot.lane.b32.xlu0 %v691, 111
  %v698 = vpop.permute.xlu0 %697
  %699 = vrot.lane.b32.xlu0 %v692, 111
  %v700 = vpop.permute.xlu0 %699
  %701 = vrot.lane.b32.xlu0 %v693, 111
  %v702 = vpop.permute.xlu0 %701
  %v703 = vsel %vm279, %v698, %v700
  %v704 = vsel %vm279, %v700, %v702
  %707 = vst [vmem:[#allocation4 + $0x40] sm:$0xff] %v703
  %708 = vst [vmem:[#allocation4 + $0x48] sm:$0xff] %v704
  %v709 = vld [vmem:[#allocation3] sm:$0xff]
  %v710 = vld [vmem:[#allocation3 + $0x8] sm:$0xff]
  %v711 = vld [vmem:[#allocation3 + $0x10] sm:$0xff]
  %v712 = vmul.f32 %v709, %v308
  %v713 = vmul.f32 %v710, %v312
  %v714 = vmul.f32 %v711, %v310
  %718 = vrot.lane.b32.xlu0 %v712, 110
  %v719 = vpop.permute.xlu0 %718
  %720 = vrot.lane.b32.xlu0 %v713, 110
  %v721 = vpop.permute.xlu0 %720
  %722 = vrot.lane.b32.xlu0 %v714, 110
  %v723 = vpop.permute.xlu0 %722
  %v724 = vsel %vm328, %v719, %v721
  %v725 = vsel %vm328, %v721, %v723
  %728 = vst [vmem:[#allocation4 + $0x50] sm:$0xff] %v724
  %729 = vst [vmem:[#allocation4 + $0x58] sm:$0xff] %v725
  %v730 = vld [vmem:[#allocation3] sm:$0xff]
  %v731 = vld [vmem:[#allocation3 + $0x8] sm:$0xff]
  %v732 = vld [vmem:[#allocation3 + $0x10] sm:$0xff]
  %v733 = vmul.f32 %v730, %v363
  %v734 = vmul.f32 %v731, %v367
  %v735 = vmul.f32 %v732, %v365
  %739 = vrot.lane.b32.xlu0 %v733, 96
  %v740 = vpop.permute.xlu0 %739
  %741 = vrot.lane.b32.xlu0 %v734, 96
  %v742 = vpop.permute.xlu0 %741
  %743 = vrot.lane.b32.xlu0 %v735, 96
  %v744 = vpop.permute.xlu0 %743
  %v745 = vsel %vm383, %v740, %v742
  %v746 = vsel %vm383, %v742, %v744
  %749 = vst [vmem:[#allocation4 + $0x60] sm:$0xff] %v745
  %750 = vst [vmem:[#allocation4 + $0x68] sm:$0xff] %v746
  %v751 = vld [vmem:[#allocation3] sm:$0xff]
  %v752 = vld [vmem:[#allocation3 + $0x8] sm:$0xff]
  %v753 = vld [vmem:[#allocation3 + $0x10] sm:$0xff]
  %757 = vrot.lane.b32.xlu0 %v751, 95
  %v758 = vpop.permute.xlu0 %757
  %759 = vrot.lane.b32.xlu0 %v752, 95
  %v760 = vpop.permute.xlu0 %759
  %761 = vrot.lane.b32.xlu0 %v753, 95
  %v762 = vpop.permute.xlu0 %761
  %v763 = vsel %vm426, %v758, %v760
  %v764 = vsel %vm426, %v760, %v762
  %767 = vst [vmem:[#allocation4 + $0x70] sm:$0xff] %v763
  %768 = vst [vmem:[#allocation4 + $0x78] sm:$0xff] %v764
  %v769 = vld [vmem:[#allocation3] sm:$0xff]
  %v770 = vld [vmem:[#allocation3 + $0x8] sm:$0xff]
  %v771 = vld [vmem:[#allocation3 + $0x10] sm:$0xff]
  %v772 = vmul.f32 %v769, %v458
  %v773 = vmul.f32 %v770, %v462
  %v774 = vmul.f32 %v771, %v460
  %778 = vrot.lane.b32.xlu0 %v772, 94
  %v779 = vpop.permute.xlu0 %778
  %780 = vrot.lane.b32.xlu0 %v773, 94
  %v781 = vpop.permute.xlu0 %780
  %782 = vrot.lane.b32.xlu0 %v774, 94
  %v783 = vpop.permute.xlu0 %782
  %v784 = vsel %vm478, %v779, %v781
  %v785 = vsel %vm478, %v781, %v783
  %788 = vst [vmem:[#allocation4 + $0x80] sm:$0xff] %v784
  %789 = vst [vmem:[#allocation4 + $0x88] sm:$0xff] %v785
  %v790 = vld [vmem:[#allocation4] sm:$0xff]
  %v791 = vld [vmem:[#allocation4 + $0x8] sm:$0xff]
  %v792 = vld [vmem:[#allocation4 + $0x10] sm:$0xff]
  %v793 = vld [vmem:[#allocation4 + $0x18] sm:$0xff]
  %v794 = vld [vmem:[#allocation4 + $0x20] sm:$0xff]
  %v795 = vld [vmem:[#allocation4 + $0x28] sm:$0xff]
  %v796 = vld [vmem:[#allocation4 + $0x30] sm:$0xff]
  %v797 = vld [vmem:[#allocation4 + $0x38] sm:$0xff]
  %v798 = vld [vmem:[#allocation4 + $0x40] sm:$0xff]
  %v799 = vld [vmem:[#allocation4 + $0x48] sm:$0xff]
  %v800 = vld [vmem:[#allocation4 + $0x50] sm:$0xff]
  %v801 = vld [vmem:[#allocation4 + $0x58] sm:$0xff]
  %v802 = vld [vmem:[#allocation4 + $0x60] sm:$0xff]
  %v803 = vld [vmem:[#allocation4 + $0x68] sm:$0xff]
  %v804 = vld [vmem:[#allocation4 + $0x70] sm:$0xff]
  %v805 = vld [vmem:[#allocation4 + $0x78] sm:$0xff]
  %v806 = vld [vmem:[#allocation4 + $0x80] sm:$0xff]
  %v807 = vld [vmem:[#allocation4 + $0x88] sm:$0xff]
  %vm808 = vcmask 588800
  %v810 = vsel %vm808, %v57, 0
  %812 = vmatprep.subr.mxu0 0.0
  %813 = vmatpush1.msra.mxu0 0.0
  %814 = vmatprep.subr.mxu0 0.0
  %815 = vmatpush1.msra.mxu0 0.0
  %816 = vmatprep.subr.mxu0 0.0
  %817 = vmatpush1.msra.mxu0 0.0
  %818 = vmatprep.subr.mxu0 0.0
  %819 = vmatpush1.msra.mxu0 0.0
  %820 = vmatprep.subr.mxu0 0.0
  %821 = vmatpush1.msra.mxu0 0.0
  %822 = vmatprep.subr.mxu0 0.0
  %823 = vmatpush1.msra.mxu0 0.0
  %824 = vmatprep.subr.mxu0 0.0
  %825 = vmatpush1.msra.mxu0 0.0
  %826 = vmatprep.subr.mxu0 %v807
  %827 = vmatpush1.msra.mxu0 %v806
  %828 = vmatprep.subr.mxu0 %v805
  %829 = vmatpush1.msra.mxu0 %v804
  %830 = vmatprep.subr.mxu0 %v803
  %831 = vmatpush1.msra.mxu0 %v802
  %832 = vmatprep.subr.mxu0 %v801
  %833 = vmatpush1.msra.mxu0 %v800
  %834 = vmatprep.subr.mxu0 %v799
  %835 = vmatpush1.msra.mxu0 %v798
  %836 = vmatprep.subr.mxu0 %v797
  %837 = vmatpush1.msra.mxu0 %v796
  %838 = vmatprep.subr.mxu0 %v795
  %839 = vmatpush1.msra.mxu0 %v794
  %840 = vmatprep.subr.mxu0 %v793
  %841 = vmatpush1.msra.mxu0 %v792
  %842 = vmatprep.subr.mxu0 %v791
  %843 = vmatpush1.msra.mxu0 %v790
  %844 = vmatprep.subr.mxu0 0.0
  %845 = vmatpush2.msra.mxu0 0.0
  %846 = vmatprep.subr.mxu0 0.0
  %847 = vmatpush2.msra.mxu0 0.0
  %848 = vmatprep.subr.mxu0 0.0
  %849 = vmatpush2.msra.mxu0 0.0
  %850 = vmatprep.subr.mxu0 0.0
  %851 = vmatpush2.msra.mxu0 0.0
  %852 = vmatprep.subr.mxu0 0.0
  %853 = vmatpush2.msra.mxu0 0.0
  %854 = vmatprep.subr.mxu0 0.0
  %855 = vmatpush2.msra.mxu0 0.0
  %856 = vmatprep.subr.mxu0 0.0
  %857 = vmatpush2.msra.mxu0 0.0
  %858 = vmatprep.subr.mxu0 0.0
  %859 = vmatpush2.msra.mxu0 0.0
  %860 = vmatprep.subr.mxu0 0.0
  %861 = vmatpush2.msra.mxu0 0.0
  %862 = vmatprep.subr.mxu0 0.0
  %863 = vmatpush2.msra.mxu0 0.0
  %864 = vmatprep.subr.mxu0 0.0
  %865 = vmatpush2.msra.mxu0 0.0
  %866 = vmatprep.subr.mxu0 0.0
  %867 = vmatpush2.msra.mxu0 0.0
  %868 = vmatprep.subr.mxu0 0.0
  %869 = vmatpush2.msra.mxu0 0.0
  %870 = vmatprep.subr.mxu0 0.0
  %871 = vmatpush2.msra.mxu0 0.0
  %872 = vmatprep.subr.mxu0 0.0
  %873 = vmatpush2.msra.mxu0 0.0
  %874 = vmatprep.subr.mxu0 0.0
  %875 = vmatpush2.msra.mxu0 0.0
  %876 = vmatprep.mubr.f32.mxu0 0.0
  %877 = vmatmul.mubr.f32.gmra.mxu0 %v810
  %v878 = vpop.f32.mrf.mxu0
  %v879 = vadd.f32 0.0, %v878
  %v880 = vpop.f32.mrf.mxu0
  %v881 = vadd.f32 0.0, %v880
  %882 = vdwg.mxu0
  %v885 = vcombine.low %v879, %v881
  %v887 = vunpack.c.l.s4 1983009808
  %v888 = vunpack.c.0.s8 %v887
  %v889 = vlaneseq
  %v890 = vshrl.u32 %v889, 7
  %v891 = vsub.s32 %v888, %v890
  %v892 = vrot.slane %v885, %v891
  %v894 = vadd.f32 %v62, %v892
  %v896 = vlaneseq
  %v897 = vshrl.u32 %v896, 7
  %v898 = vsub.s32 0, %v897
  %v899 = vrot.slane %v59, %v898
  %900 = vset.pattern.permute.xlu0 0
  %901 = vperm.xlu0 %900, %v899
  %v902 = vpop.permute.xlu0 %901
  %v904 = vadd.f32 %v894, %v902
  %905 = vst [vmem:[%s7] sm:$0xf] %v904
  // Predicated region
  $region26: #{gra_forward.1} parent=0 // pred_check
    _
  $region27: #{gra_forward.1} parent=0 // pred_check_branch
    %907 = sbr.rel (0) target = $region29
  $region28: #{gra_forward.1} parent=0 // pred_region
    _
  $region29: #{gra_forward.1} parent=0 // pred_fallthru
    _
  // Predicated region
  $region30: #{gra_forward.1} parent=0 // pred_check
    _
  $region31: #{gra_forward.1} parent=0 // pred_check_branch
    %909 = sbr.rel (0) target = $region33
  $region32: #{gra_forward.1} parent=0 // pred_region
    _
  $region33: #{gra_forward.1} parent=0 // pred_fallthru
    _
  // Predicated region
  $region34: #{gra_forward.1} parent=0 // pred_check
    _
  $region35: #{gra_forward.1} parent=0 // pred_check_branch
    %911 = sbr.rel (0) target = $region37
  $region36: #{gra_forward.1} parent=0 // pred_region
    _
  $region37: #{gra_forward.1} parent=0 // pred_fallthru
    _
  // Predicated region
  $region38: #{gra_forward.1} parent=0 // pred_check
    _
  $region39: #{gra_forward.1} parent=0 // pred_check_branch
    %913 = sbr.rel (0) target = $region41
  $region40: #{gra_forward.1} parent=0 // pred_region
    _
  $region41: #{gra_forward.1} parent=0 // pred_fallthru
    _

</llo_original>
